<compile_context>
chip_gen: v7x
topology: tpu7x:2x2x1
jax: 0.10.0
libtpu: 0.0.40
codegen_flags: <defaults>
</compile_context>

<pallas_src>
import functools

import jax
import jax.numpy as jnp
from jax import lax
from jax.experimental import pallas as pl
from jax.experimental.pallas import tpu as pltpu


_LHS_ROWS = 16  # bf16 sublane tile height for the small matmul LHS.


def _lovasz_softmax_class_kernel(
    logits_ref,   # (C, Np) f32 : classes on sublanes, pixels on lanes
    tgt_ref,      # (1, Np) i32 : flattened labels, padded pixels = -1
    out_ref,      # (1, 1)  f32 : per-class loss (leading class dim squeezed)
    *, num_classes, num_valid):
  C = num_classes
  Np = logits_ref.shape[1]
  c = pl.program_id(0)

  # -------------------------------------------------------------- softmax
  # Row-oriented softmax probability of class c, p_row : (1, Np).
  logits = logits_ref[...]                          # (C, Np)
  m = logits[0:1, :]
  for k in range(1, C):
    m = jnp.maximum(m, logits[k:k + 1, :])
  e = jnp.exp(logits - m)                           # (C, Np)
  den = e[0:1, :]
  num = jnp.where(c == 0, den, jnp.zeros_like(den))
  for k in range(1, C):
    ek = e[k:k + 1, :]
    den = den + ek
    num = jnp.where(c == k, ek, num)
  p_row = num / den                                 # (1, Np)

  # ---------------------------------------------------------------- errors
  lane_n = lax.broadcasted_iota(jnp.int32, (1, Np), 1)
  valid_row = lane_n < num_valid
  gt_row = jnp.where(tgt_ref[...] == c, 1.0, 0.0)               # (1, Np)
  err_row = jnp.where(valid_row, jnp.abs(gt_row - p_row), 0.0)  # (1, Np)
  # Padded pixels: gt = 0, err = 0 -> ranked after every valid pixel, zero loss.

  # err along sublanes for the pairwise compare: tiny aligned (8,Np)->(Np,8)
  # transpose of a bit-exact copy of err_row (ties compare exactly).
  err_col = jnp.transpose(jnp.broadcast_to(err_row, (8, Np)))[:, 0:1]  # (Np, 1)

  # -------------------------------------------- strict "ranked before" mask
  # before[m, n] = 1 iff pixel m precedes pixel n in a stable descending sort
  # of err:  err[m] > err[n]  or  (err[m] == err[n]  and  m < n).
  sub_i = lax.broadcasted_iota(jnp.int32, (Np, Np), 0)
  lane_i = lax.broadcasted_iota(jnp.int32, (Np, Np), 1)
  before = (err_col > err_row) | ((err_col == err_row) & (sub_i < lane_i))
  cmp = jnp.where(before, 1.0, 0.0).astype(jnp.bfloat16)         # (Np, Np) 0/1

  # ------------------------------------------------ single MXU prefix matmul
  # lhs rows: [gt; ones; 0...]  (exact 0/1 in bf16, f32 accumulate)
  #   row 0 @ cmp -> cum_gt_prev[n] = sum_{m ranked before n} gt[m]
  #   row 1 @ cmp -> pos[n]         = 0-based descending-sort rank of pixel n
  row_i = lax.broadcasted_iota(jnp.int32, (_LHS_ROWS, Np), 0)
  gt_b = jnp.broadcast_to(gt_row, (_LHS_ROWS, Np))
  lhs = jnp.where(row_i == 0, gt_b,
                  jnp.where(row_i == 1, 1.0, 0.0)).astype(jnp.bfloat16)
  sums = jnp.dot(lhs, cmp, preferred_element_type=jnp.float32)   # (_LHS_ROWS, Np)
  cum_gt_prev = sums[0:1, :]                                     # (1, Np)
  pos = sums[1:2, :]                                             # (1, Np)

  # --------------------------------------------- per-pixel lovasz_grad * err
  gts = jnp.sum(gt_row, axis=1, keepdims=True)                   # (1, 1)
  cum_gt = cum_gt_prev + gt_row                                  # inclusive prefix
  union = gts + (pos + 1.0) - cum_gt                             # >= 1 always
  jac = 1.0 - (gts - cum_gt) / union
  union_p = jnp.where(pos < 0.5, 1.0, gts + pos - cum_gt_prev)   # >= 1 for pos >= 1
  jac_prev = jnp.where(pos < 0.5, 0.0, 1.0 - (gts - cum_gt_prev) / union_p)
  grad = jac - jac_prev
  out_ref[...] = jnp.sum(err_row * grad, axis=1, keepdims=True)  # (1, 1)


def _vmem_limit_bytes():
  """~3/4 of the chip's physical VMEM, capped, with a safe fallback."""
  try:
    info = pltpu.get_tpu_info()
    cap = getattr(info, "vmem_capacity_bytes", None)
    if not cap:
      cap = getattr(info, "vmem_size_bytes", None)
    if cap:
      return int(min(112 * 1024 * 1024, max(32 * 1024 * 1024, (cap * 3) // 4)))
  except Exception:
    pass
  return 32 * 1024 * 1024


def lovasz_softmax(x_nchw, target_bhw, reduction='mean'):
  """Forward pass of LovaszSoftmax for 4-D inputs (NCHW logits, BHW labels)."""
  B, C, H, W = x_nchw.shape
  N = B * H * W
  Np = ((N + 255) // 256) * 256           # lane-dense + full MXU cadence (v6e/v7x)

  x = x_nchw.astype(jnp.float32)
  # PyTorch: F.softmax(x, dim=1).permute(0,2,3,1).view(-1, C); pixel order (b,h,w).
  logits_cn = jnp.transpose(x, (1, 0, 2, 3)).reshape(C, N)
  tgt_row = target_bhw.reshape(1, N).astype(jnp.int32)
  if Np != N:
    pad = Np - N
    logits_cn = jnp.pad(logits_cn, ((0, 0), (0, pad)))
    tgt_row = jnp.pad(tgt_row, ((0, 0), (0, pad)), constant_values=-1)

  kernel = functools.partial(
      _lovasz_softmax_class_kernel, num_classes=C, num_valid=N)

  cost = pl.CostEstimate(
      flops=int(C * (2 * _LHS_ROWS + 8) * Np * Np),
      transcendentals=int(C * C * Np),
      bytes_accessed=int(C * Np * 4 + Np * 4 + C * 4))

  losses = pl.pallas_call(
      kernel,
      out_shape=jax.ShapeDtypeStruct((C, 1, 1), jnp.float32),
      grid=(C,),
      in_specs=[
          # Constant index maps: blocks stay resident in VMEM across class steps.
          pl.BlockSpec((C, Np), lambda c: (0, 0)),
          pl.BlockSpec((1, Np), lambda c: (0, 0)),
      ],
      out_specs=pl.BlockSpec((None, 1, 1), lambda c: (c, 0, 0)),
      compiler_params=pltpu.CompilerParams(
          dimension_semantics=("parallel",),        # classes shard across TCs (v7x)
          vmem_limit_bytes=_vmem_limit_bytes()),
      cost_estimate=cost,
  )(logits_cn, tgt_row)

  losses = losses[:, 0, 0]                          # (C,) per-class losses
  if reduction == 'none':
    return losses
  if reduction == 'sum':
    return jnp.sum(losses)
  return jnp.mean(losses)


def _reference_lovasz(x_nchw, target_bhw, reduction='mean'):
  """Pure-JAX reference mirroring the PyTorch module."""
  B, C, H, W = x_nchw.shape
  probs = jax.nn.softmax(x_nchw.astype(jnp.float32), axis=1)
  probs_f = jnp.transpose(probs, (0, 2, 3, 1)).reshape(-1, C)
  tgt_f = target_bhw.reshape(-1)
  losses = []
  for c in range(C):
    gt = (tgt_f == c).astype(jnp.float32)
    err = jnp.abs(gt - probs_f[:, c])
    order = jnp.argsort(-err)               # stable descending sort
    err_s = err[order]
    gt_s = gt[order]
    gts = gt_s.sum()
    inter = gts - jnp.cumsum(gt_s)
    union = gts + jnp.cumsum(1.0 - gt_s)
    jac = 1.0 - inter / union
    jac = jnp.concatenate([jac[:1], jac[1:] - jac[:-1]])
    losses.append(jnp.dot(err_s, jac))
  losses = jnp.stack(losses)
  if reduction == 'none':
    return losses
  if reduction == 'sum':
    return losses.sum()
  return losses.mean()


if __name__ == "__main__":
  key = jax.random.PRNGKey(0)
  k1, k2 = jax.random.split(key)
  B, C, H, W = 2, 4, 16, 16
  x = jax.random.normal(k1, (B, C, H, W), dtype=jnp.float32)
  target = jax.random.randint(k2, (B, H, W), 0, C, dtype=jnp.int32)

  loss = jax.block_until_ready(lovasz_softmax(x, target))
  ref = jax.block_until_ready(_reference_lovasz(x, target))
  assert abs(float(loss) - float(ref)) < 1e-3, (float(loss), float(ref))
  print("KERNEL_OK")
</pallas_src>

<mosaic_0001>
module attributes {stable_mosaic.version = 11 : i64} {
  func.func @_lovasz_softmax_class_kernel(%arg0: i32, %arg1: memref<4x512xf32, #tpu.memory_space<vmem>>, %arg2: memref<1x512xi32, #tpu.memory_space<vmem>>, %arg3: memref<1x1x1xf32, #tpu.memory_space<vmem>>) attributes {dimension_semantics = [#tpu.dimension_semantics<parallel>], iteration_bounds = array<i64: 4>, scalar_prefetch = 0 : i64, scratch_operands = 0 : i64, tpu.core_type = #tpu.core_type<tc>, window_params = [{pipeline_mode = #tpu.pipeline_mode<synchronous>, transform_indices = @transform_0, window_bounds = array<i64: 4, 512>}, {pipeline_mode = #tpu.pipeline_mode<synchronous>, transform_indices = @transform_1, window_bounds = array<i64: 1, 512>}, {transform_indices = @transform_2, window_bounds = array<i64: 1, 1, 1>}]} {
    %c0 = arith.constant 0 : index
    %c0_0 = arith.constant 0 : index
    %0 = vector.load %arg1[%c0, %c0_0] : memref<4x512xf32, #tpu.memory_space<vmem>>, vector<4x512xf32>
    %1 = vector.extract_strided_slice %0 {offsets = [0, 0], sizes = [1, 512], strides = [1, 1]} : vector<4x512xf32> to vector<1x512xf32>
    %2 = vector.extract_strided_slice %0 {offsets = [1, 0], sizes = [1, 512], strides = [1, 1]} : vector<4x512xf32> to vector<1x512xf32>
    %3 = arith.maximumf %1, %2 : vector<1x512xf32>
    %4 = vector.extract_strided_slice %0 {offsets = [2, 0], sizes = [1, 512], strides = [1, 1]} : vector<4x512xf32> to vector<1x512xf32>
    %5 = arith.maximumf %3, %4 : vector<1x512xf32>
    %6 = vector.extract_strided_slice %0 {offsets = [3, 0], sizes = [1, 512], strides = [1, 1]} : vector<4x512xf32> to vector<1x512xf32>
    %7 = arith.maximumf %5, %6 : vector<1x512xf32>
    %8 = vector.broadcast %7 : vector<1x512xf32> to vector<4x512xf32>
    %9 = arith.subf %0, %8 : vector<4x512xf32>
    %10 = math.exp %9 : vector<4x512xf32>
    %11 = vector.extract_strided_slice %10 {offsets = [0, 0], sizes = [1, 512], strides = [1, 1]} : vector<4x512xf32> to vector<1x512xf32>
    %c0_i32 = arith.constant 0 : i32
    %12 = arith.cmpi eq, %arg0, %c0_i32 : i32
    %cst = arith.constant 0.000000e+00 : f32
    %13 = vector.broadcast %cst : f32 to vector<1x512xf32>
    %14 = arith.select %12, %11, %13 : vector<1x512xf32>
    %15 = vector.extract_strided_slice %10 {offsets = [1, 0], sizes = [1, 512], strides = [1, 1]} : vector<4x512xf32> to vector<1x512xf32>
    %16 = arith.addf %11, %15 : vector<1x512xf32>
    %c1_i32 = arith.constant 1 : i32
    %17 = arith.cmpi eq, %arg0, %c1_i32 : i32
    %18 = arith.select %17, %15, %14 : vector<1x512xf32>
    %19 = vector.extract_strided_slice %10 {offsets = [2, 0], sizes = [1, 512], strides = [1, 1]} : vector<4x512xf32> to vector<1x512xf32>
    %20 = arith.addf %16, %19 : vector<1x512xf32>
    %c2_i32 = arith.constant 2 : i32
    %21 = arith.cmpi eq, %arg0, %c2_i32 : i32
    %22 = arith.select %21, %19, %18 : vector<1x512xf32>
    %23 = vector.extract_strided_slice %10 {offsets = [3, 0], sizes = [1, 512], strides = [1, 1]} : vector<4x512xf32> to vector<1x512xf32>
    %24 = arith.addf %20, %23 : vector<1x512xf32>
    %c3_i32 = arith.constant 3 : i32
    %25 = arith.cmpi eq, %arg0, %c3_i32 : i32
    %26 = arith.select %25, %23, %22 : vector<1x512xf32>
    %27 = arith.divf %26, %24 : vector<1x512xf32>
    %28 = tpu.iota {dimensions = array<i32: 1>} : vector<1x512xi32>
    %c512_i32 = arith.constant 512 : i32
    %29 = vector.broadcast %c512_i32 : i32 to vector<1x512xi32>
    %30 = arith.cmpi slt, %28, %29 : vector<1x512xi32>
    %c0_1 = arith.constant 0 : index
    %c0_2 = arith.constant 0 : index
    %31 = vector.load %arg2[%c0_1, %c0_2] : memref<1x512xi32, #tpu.memory_space<vmem>>, vector<1x512xi32>
    %32 = vector.broadcast %arg0 : i32 to vector<1x512xi32>
    %33 = arith.cmpi eq, %31, %32 : vector<1x512xi32>
    %cst_3 = arith.constant 1.000000e+00 : f32
    %cst_4 = arith.constant 0.000000e+00 : f32
    %34 = vector.broadcast %cst_3 : f32 to vector<1x512xf32>
    %35 = vector.broadcast %cst_4 : f32 to vector<1x512xf32>
    %36 = arith.select %33, %34, %35 : vector<1x512xi1>, vector<1x512xf32>
    %37 = arith.subf %36, %27 : vector<1x512xf32>
    %38 = math.absf %37 : vector<1x512xf32>
    %cst_5 = arith.constant 0.000000e+00 : f32
    %39 = vector.broadcast %cst_5 : f32 to vector<1x512xf32>
    %40 = arith.select %30, %38, %39 : vector<1x512xi1>, vector<1x512xf32>
    %41 = vector.shape_cast %40 : vector<1x512xf32> to vector<1x512xf32>
    %42 = vector.broadcast %41 : vector<1x512xf32> to vector<8x512xf32>
    %43 = tpu.transpose %42, [1, 0] : vector<8x512xf32> -> vector<512x8xf32>
    %44 = vector.extract_strided_slice %43 {offsets = [0, 0], sizes = [512, 1], strides = [1, 1]} : vector<512x8xf32> to vector<512x1xf32>
    %45 = tpu.iota {dimensions = array<i32: 0>} : vector<512x512xi32>
    %46 = tpu.iota {dimensions = array<i32: 1>} : vector<512x512xi32>
    %47 = vector.broadcast %44 : vector<512x1xf32> to vector<512x512xf32>
    %48 = vector.broadcast %40 : vector<1x512xf32> to vector<512x512xf32>
    %49 = arith.cmpf ogt, %47, %48 : vector<512x512xf32>
    %50 = vector.broadcast %44 : vector<512x1xf32> to vector<512x512xf32>
    %51 = vector.broadcast %40 : vector<1x512xf32> to vector<512x512xf32>
    %52 = arith.cmpf oeq, %50, %51 : vector<512x512xf32>
    %53 = arith.cmpi slt, %45, %46 : vector<512x512xi32>
    %54 = arith.andi %52, %53 : vector<512x512xi1>
    %55 = arith.ori %49, %54 : vector<512x512xi1>
    %cst_6 = arith.constant 1.000000e+00 : f32
    %cst_7 = arith.constant 0.000000e+00 : f32
    %56 = vector.broadcast %cst_6 : f32 to vector<512x512xf32>
    %57 = vector.broadcast %cst_7 : f32 to vector<512x512xf32>
    %58 = arith.select %55, %56, %57 : vector<512x512xi1>, vector<512x512xf32>
    %59 = arith.truncf %58 : vector<512x512xf32> to vector<512x512xbf16>
    %60 = tpu.iota {dimensions = array<i32: 0>} : vector<16x512xi32>
    %61 = vector.shape_cast %36 : vector<1x512xf32> to vector<1x512xf32>
    %62 = vector.broadcast %61 : vector<1x512xf32> to vector<16x512xf32>
    %c0_i32_8 = arith.constant 0 : i32
    %63 = vector.broadcast %c0_i32_8 : i32 to vector<16x512xi32>
    %64 = arith.cmpi eq, %60, %63 : vector<16x512xi32>
    %c1_i32_9 = arith.constant 1 : i32
    %65 = vector.broadcast %c1_i32_9 : i32 to vector<16x512xi32>
    %66 = arith.cmpi eq, %60, %65 : vector<16x512xi32>
    %cst_10 = arith.constant 1.000000e+00 : f32
    %cst_11 = arith.constant 0.000000e+00 : f32
    %67 = vector.broadcast %cst_10 : f32 to vector<16x512xf32>
    %68 = vector.broadcast %cst_11 : f32 to vector<16x512xf32>
    %69 = arith.select %66, %67, %68 : vector<16x512xi1>, vector<16x512xf32>
    %70 = arith.select %64, %62, %69 : vector<16x512xi1>, vector<16x512xf32>
    %71 = arith.truncf %70 : vector<16x512xf32> to vector<16x512xbf16>
    %cst_12 = arith.constant dense<0.000000e+00> : vector<16x512xf32>
    %72 = tpu.matmul %71, %59, %cst_12 {dimension_numbers = #tpu.dot_dimension_numbers<[1], [0], [0], [1], [0, 0, 1, 1], [], []>} : vector<16x512xbf16>, vector<512x512xbf16>, vector<16x512xf32> -> vector<16x512xf32>
    %73 = vector.extract_strided_slice %72 {offsets = [0, 0], sizes = [1, 512], strides = [1, 1]} : vector<16x512xf32> to vector<1x512xf32>
    %74 = vector.extract_strided_slice %72 {offsets = [1, 0], sizes = [1, 512], strides = [1, 1]} : vector<16x512xf32> to vector<1x512xf32>
    %cst_13 = arith.constant dense<0.000000e+00> : vector<1xf32>
    %75 = vector.multi_reduction <add>, %36, %cst_13 [1] : vector<1x512xf32> to vector<1xf32>
    %76 = vector.shape_cast %75 : vector<1xf32> to vector<1x1xf32>
    %77 = arith.addf %73, %36 : vector<1x512xf32>
    %cst_14 = arith.constant 1.000000e+00 : f32
    %78 = vector.broadcast %cst_14 : f32 to vector<1x512xf32>
    %79 = arith.addf %74, %78 : vector<1x512xf32>
    %80 = vector.broadcast %76 : vector<1x1xf32> to vector<1x512xf32>
    %81 = arith.addf %80, %79 : vector<1x512xf32>
    %82 = arith.subf %81, %77 : vector<1x512xf32>
    %83 = vector.broadcast %76 : vector<1x1xf32> to vector<1x512xf32>
    %84 = arith.subf %83, %77 : vector<1x512xf32>
    %85 = arith.divf %84, %82 : vector<1x512xf32>
    %cst_15 = arith.constant 1.000000e+00 : f32
    %86 = vector.broadcast %cst_15 : f32 to vector<1x512xf32>
    %87 = arith.subf %86, %85 : vector<1x512xf32>
    %cst_16 = arith.constant 5.000000e-01 : f32
    %88 = vector.broadcast %cst_16 : f32 to vector<1x512xf32>
    %89 = arith.cmpf olt, %74, %88 : vector<1x512xf32>
    %90 = vector.broadcast %76 : vector<1x1xf32> to vector<1x512xf32>
    %91 = arith.addf %90, %74 : vector<1x512xf32>
    %92 = arith.subf %91, %73 : vector<1x512xf32>
    %cst_17 = arith.constant 1.000000e+00 : f32
    %93 = vector.broadcast %cst_17 : f32 to vector<1x512xf32>
    %94 = arith.select %89, %93, %92 : vector<1x512xi1>, vector<1x512xf32>
    %cst_18 = arith.constant 5.000000e-01 : f32
    %95 = vector.broadcast %cst_18 : f32 to vector<1x512xf32>
    %96 = arith.cmpf olt, %74, %95 : vector<1x512xf32>
    %97 = vector.broadcast %76 : vector<1x1xf32> to vector<1x512xf32>
    %98 = arith.subf %97, %73 : vector<1x512xf32>
    %99 = arith.divf %98, %94 : vector<1x512xf32>
    %cst_19 = arith.constant 1.000000e+00 : f32
    %100 = vector.broadcast %cst_19 : f32 to vector<1x512xf32>
    %101 = arith.subf %100, %99 : vector<1x512xf32>
    %cst_20 = arith.constant 0.000000e+00 : f32
    %102 = vector.broadcast %cst_20 : f32 to vector<1x512xf32>
    %103 = arith.select %96, %102, %101 : vector<1x512xi1>, vector<1x512xf32>
    %104 = arith.subf %87, %103 : vector<1x512xf32>
    %105 = arith.mulf %40, %104 : vector<1x512xf32>
    %cst_21 = arith.constant dense<0.000000e+00> : vector<1xf32>
    %106 = vector.multi_reduction <add>, %105, %cst_21 [1] : vector<1x512xf32> to vector<1xf32>
    %107 = vector.shape_cast %106 : vector<1xf32> to vector<1x1xf32>
    %c0_22 = arith.constant 0 : index
    %c0_23 = arith.constant 0 : index
    %c0_24 = arith.constant 0 : index
    %108 = vector.load %arg3[%c0_22, %c0_23, %c0_24] : memref<1x1x1xf32, #tpu.memory_space<vmem>>, vector<1x1x1xf32>
    %109 = vector.shape_cast %108 : vector<1x1x1xf32> to vector<1x1xf32>
    %110 = vector.shape_cast %107 : vector<1x1xf32> to vector<1x1x1xf32>
    tpu.vector_store %arg3[%c0_22, %c0_23, %c0_24], %110 {strides = array<i32>} : memref<1x1x1xf32, #tpu.memory_space<vmem>>, vector<1x1x1xf32>,
    return
  }
  func.func @transform_0(%arg0: i32) -> (i32, i32) {
    %c0_i32 = arith.constant 0 : i32
    %c0_i32_0 = arith.constant 0 : i32
    %c0_i32_1 = arith.constant 0 : i32
    return %c0_i32, %c0_i32_0 : i32, i32
  }
  func.func @transform_1(%arg0: i32) -> (i32, i32) {
    %c0_i32 = arith.constant 0 : i32
    %c0_i32_0 = arith.constant 0 : i32
    %c0_i32_1 = arith.constant 0 : i32
    return %c0_i32, %c0_i32_0 : i32, i32
  }
  func.func @transform_2(%arg0: i32) -> (i32, i32, i32) {
    %c0_i32 = arith.constant 0 : i32
    %c0_i32_0 = arith.constant 0 : i32
    %c0_i32_1 = arith.constant 0 : i32
    return %arg0, %c0_i32, %c0_i32_0 : i32, i32, i32
  }
}

</mosaic_0001>

<llo_original>
// kernel: tpu_custom_call.1
$region0: #{tpu_custom_call.1}
  #allocation0 [shape = 'u32[]', space=smem, size = 0x4, offset = 0x4, fixed_abs, tag = 'smem constant byte address 0x4 - core index']
  #allocation1 [shape = 'u32[144,128]{1,0:T(1,128)}', space=vmem, size = 0x12000, scoped, tag = 'internal scratch']
  %s0 = inlined_call_operand.hbm [shape: f32[4,512], index: 0, kind: input, shape index: {}]
  %s1 = inlined_call_operand.hbm [shape: s32[1,512], index: 1, kind: input, shape index: {}]
  %s2 = inlined_call_operand.vmem [shape: f32[4,1,1], index: 2, kind: output, shape index: {}]
  %s3 = sld [smem:[#allocation0]]
  $region49: #{tpu_custom_call.1} parent=0
    _
  %s5 = ssub.s32 1, %s3
  %s6 = scalar_select 0, %s5, %s3
  $region1: #{tpu_custom_call.1} parent=0
    #allocation2 [shape = 'u8[8192]{0}', space=vmem, size = 0x2000, scoped, tag = 'input window, operand 0, single buffered']
    #allocation3 [shape = 's32[2]{0}', space=sflag, size = 0x8, scoped, tag = 'scoped memory for tpu_custom_call.1']
    #allocation4 [shape = 'u8[2048]{0}', space=vmem, size = 0x800, scoped, tag = 'input window, operand 1, single buffered']
    #allocation5 [shape = 's32[1]{0}', space=sflag, size = 0x4, scoped, tag = 'scoped memory for tpu_custom_call.1']
    %7 = vsyncpa [#allocation3], 0
    %8 = vsyncpa [#allocation5], 0
    loop: start=0, step=1, limit=6
    $region2: #{tpu_custom_call.1} parent=1 // loop_pre_header
      _
    $region3: #{tpu_custom_call.1} parent=1 // loop_header
      %s10 = sphi 0, %s14
      %p11 = scmp.ge.s32.totalorder %s10, 6
      %s18 = sphi 0, %s18
      %s20 = sphi 0, %s18
      %s21 = sphi 0, %s20
      %s35 = sphi 0, %s21
      %s39 = sphi 0, %s39
      %s41 = sphi 0, %s39
      %s42 = sphi 0, %s41
      %s56 = sphi 0, %s42
      %s62 = sphi 0, %s64
      %s65 = sphi 0, %s62
      %s66 = sphi 0, %s65
      %s82 = sphi 0, %s66
    $region4: #{tpu_custom_call.1} parent=1 // loop_header_branch
      %13 = sbr.rel (%p11) target = $region8
    $region5: #{tpu_custom_call.1} parent=1 // loop_body
      %s15 = ssub.s32 %s10, 1
      %s16 = ssub.s32 %s10, 2
      %s17 = sadd.s32 %s10, 1
      %s19 = sadd.s32 %s18, 1
      %p22 = scmp.eq.s32.totalorder %s10, 3
      %p23 = scmp.ne.s32.totalorder %s18, %s20
      %p24 = scmp.eq.s32.totalorder %s10, 0
      %p25 = por %p23, %p24
      %p26 = scmp.ne.s32.totalorder %s18, %s20
      %p27 = scmp.eq.s32.totalorder %s15, 3
      %p28 = por %p26, %p27
      %p29 = scmp.ne.s32.totalorder %s20, %s21
      %p30 = scmp.eq.s32.totalorder %s15, 0
      %p31 = por %p29, %p30
      %p32 = scmp.ne.s32.totalorder %s20, %s21
      %p33 = scmp.eq.s32.totalorder %s16, 3
      %p34 = por %p32, %p33
      %p36 = scmp.ne.s32.totalorder %s21, %s35
      %p37 = scmp.eq.s32.totalorder %s16, 0
      %p38 = por %p36, %p37
      %s40 = sadd.s32 %s39, 1
      %p43 = scmp.eq.s32.totalorder %s10, 3
      %p44 = scmp.ne.s32.totalorder %s39, %s41
      %p45 = scmp.eq.s32.totalorder %s10, 0
      %p46 = por %p44, %p45
      %p47 = scmp.ne.s32.totalorder %s39, %s41
      %p48 = scmp.eq.s32.totalorder %s15, 3
      %p49 = por %p47, %p48
      %p50 = scmp.ne.s32.totalorder %s41, %s42
      %p51 = scmp.eq.s32.totalorder %s15, 0
      %p52 = por %p50, %p51
      %p53 = scmp.ne.s32.totalorder %s41, %s42
      %p54 = scmp.eq.s32.totalorder %s16, 3
      %p55 = por %p53, %p54
      %p57 = scmp.ne.s32.totalorder %s42, %s56
      %p58 = scmp.eq.s32.totalorder %s16, 0
      %p59 = por %p57, %p58
      %s60 = ssub.s32 %s10, %s17
      %p61 = scmp.eq.s32.totalorder %s60, 0
      %s63 = sadd.s32 %s62, 1
      %s64 = scalar_select %p61, %s62, %s63
      %p67 = pneg %p61
      %p68 = scmp.eq.s32.totalorder %s10, 3
      %p69 = por %p67, %p68
      %p70 = scmp.ne.s32.totalorder %s62, %s65
      %p71 = scmp.eq.s32.totalorder %s10, 0
      %p72 = por %p70, %p71
      %p73 = scmp.ne.s32.totalorder %s62, %s65
      %p74 = scmp.eq.s32.totalorder %s15, 3
      %p75 = por %p73, %p74
      %p76 = scmp.ne.s32.totalorder %s65, %s66
      %p77 = scmp.eq.s32.totalorder %s15, 0
      %p78 = por %p76, %p77
      %p79 = scmp.ne.s32.totalorder %s65, %s66
      %p80 = scmp.eq.s32.totalorder %s16, 3
      %p81 = por %p79, %p80
      %p83 = scmp.ne.s32.totalorder %s66, %s82
      %p84 = scmp.eq.s32.totalorder %s16, 0
      %p85 = por %p83, %p84
      %p86 = scmp.le.s32.totalorder 1, %s10
      %p87 = scmp.lt.s32.totalorder %s10, 5
      %p88 = pnand %p86, %p87
      %p89 = pneg %p88
      // Predicated region
      $region9: #{tpu_custom_call.1} parent=5 // pred_check
        _
      $region10: #{tpu_custom_call.1} parent=5 // pred_check_branch
        %91 = sbr.rel (%p88) target = $region12
      $region11: #{tpu_custom_call.1} parent=5 // pred_region
        %s92 = ssub.s32 %s10, 1
        // Predicated region
        $region13: #{tpu_custom_call.1} parent=11 // pred_check
          %p93 = pneg %p31
        $region14: #{tpu_custom_call.1} parent=11 // pred_check_branch
          %95 = sbr.rel (%p93) target = $region16
        $region15: #{tpu_custom_call.1} parent=11 // pred_region
          %s97 = ssub.s32 256, 256
          %98 = vsyncadd [#allocation3], %s97
          %s100 = sshll.u32 [#allocation2], 4
          %s101 = int_to_ptr.vmem [resolvable:$true] %s100
          %103 = dma.hbm_to_vmem [thread:$0]  %s0, 256, %s101, [#allocation3]
        $region16: #{tpu_custom_call.1} parent=11 // pred_fallthru
          _
        // Predicated region
        $region17: #{tpu_custom_call.1} parent=11 // pred_check
          %p104 = pneg %p52
        $region18: #{tpu_custom_call.1} parent=11 // pred_check_branch
          %106 = sbr.rel (%p104) target = $region20
        $region19: #{tpu_custom_call.1} parent=11 // pred_region
          %s108 = ssub.s32 64, 64
          %109 = vsyncadd [#allocation5], %s108
          %s111 = sshll.u32 [#allocation4], 4
          %s112 = int_to_ptr.vmem [resolvable:$true] %s111
          %114 = dma.hbm_to_vmem [thread:$0]  %s1, 64, %s112, [#allocation5]
        $region20: #{tpu_custom_call.1} parent=11 // pred_fallthru
          _
      $region12: #{tpu_custom_call.1} parent=5 // pred_fallthru
        _
      %p115 = scmp.lt.s32.totalorder %s10, 4
      // Predicated region
      $region21: #{tpu_custom_call.1} parent=5 // pred_check
        %p116 = pneg %p115
      $region22: #{tpu_custom_call.1} parent=5 // pred_check_branch
        %118 = sbr.rel (%p116) target = $region24
      $region23: #{tpu_custom_call.1} parent=5 // pred_region
        _
      $region24: #{tpu_custom_call.1} parent=5 // pred_fallthru
        _
      %p119 = scmp.le.s32.totalorder 1, %s10
      %p120 = scmp.lt.s32.totalorder %s10, 5
      %p121 = pnand %p119, %p120
      %p122 = pneg %p121
      // Predicated region
      $region25: #{tpu_custom_call.1} parent=5 // pred_check
        _
      $region26: #{tpu_custom_call.1} parent=5 // pred_check_branch
        %124 = sbr.rel (%p121) target = $region28
      $region27: #{tpu_custom_call.1} parent=5 // pred_region
        %s125 = ssub.s32 %s10, 1
        // Predicated region
        $region29: #{tpu_custom_call.1} parent=27 // pred_check
          %p126 = pneg %p31
        $region30: #{tpu_custom_call.1} parent=27 // pred_check_branch
          %128 = sbr.rel (%p126) target = $region32
        $region31: #{tpu_custom_call.1} parent=27 // pred_region
          %129 = dma.done [#allocation3], 256
        $region32: #{tpu_custom_call.1} parent=27 // pred_fallthru
          _
        // Predicated region
        $region33: #{tpu_custom_call.1} parent=27 // pred_check
          %p130 = pneg %p52
        $region34: #{tpu_custom_call.1} parent=27 // pred_check_branch
          %132 = sbr.rel (%p130) target = $region36
        $region35: #{tpu_custom_call.1} parent=27 // pred_region
          %133 = dma.done [#allocation5], 64
        $region36: #{tpu_custom_call.1} parent=27 // pred_fallthru
          _
        %p134 = pneg %p31
        %p135 = pneg %p28
        %p136 = pneg %p52
        %p137 = pneg %p49
        %p138 = pneg %p78
        %p139 = pneg %p75
        %p140 = scmp.lt.s32.totalorder %s15, 3
        %s141 = scalar_select %p140, %s15, 3
        %s142 = scalar_lea.vmem %s2, %s141
        %p143 = scmp.lt.s32.totalorder %s15, 3
        %s144 = scalar_select %p143, %s15, 3
        %s145 = scalar_lea.vmem %s2, %s144
        %v146 = vld [vmem:[#allocation2] sm:$0xff]
        %v147 = vld [vmem:[#allocation2 + $0x8] sm:$0xff]
        %v150 = vrot.slane %v146, 5
        %v151 = vrot.slane %v150, 4
        %v152 = vrot.slane %v147, 5
        %v153 = vrot.slane %v152, 4
        %v156 = vmax.f32 %v146, %v151
        %v157 = vmax.f32 %v147, %v153
        %v158 = vrot.slane %v146, 6
        %v159 = vrot.slane %v158, 4
        %v160 = vrot.slane %v147, 6
        %v161 = vrot.slane %v160, 4
        %v164 = vmax.f32 %v156, %v159
        %v165 = vmax.f32 %v157, %v161
        %v166 = vrot.slane %v146, 7
        %v167 = vrot.slane %v166, 4
        %v168 = vrot.slane %v147, 7
        %v169 = vrot.slane %v168, 4
        %v172 = vmax.f32 %v164, %v167
        %v173 = vmax.f32 %v165, %v169
        %v176 = vlaneseq
        %v177 = vshrl.u32 %v176, 7
        %v178 = vsub.s32 0, %v177
        %v179 = vrot.slane %v172, %v178
        %v180 = vlaneseq
        %v181 = vshrl.u32 %v180, 7
        %v182 = vsub.s32 4, %v181
        %v183 = vrot.slane %v172, %v182
        %v184 = vlaneseq
        %v185 = vshrl.u32 %v184, 7
        %v186 = vsub.s32 0, %v185
        %v187 = vrot.slane %v173, %v186
        %v188 = vlaneseq
        %v189 = vshrl.u32 %v188, 7
        %v190 = vsub.s32 4, %v189
        %v191 = vrot.slane %v173, %v190
        %v196 = vlaneseq
        %v197 = vshrl.u32 %v196, 7
        %v198 = vsub.s32 0, %v197
        %v199 = vrot.slane %v179, %v198
        %v200 = vlaneseq
        %v201 = vshrl.u32 %v200, 7
        %v202 = vsub.s32 0, %v201
        %v203 = vrot.slane %v183, %v202
        %v204 = vlaneseq
        %v205 = vshrl.u32 %v204, 7
        %v206 = vsub.s32 0, %v205
        %v207 = vrot.slane %v187, %v206
        %v208 = vlaneseq
        %v209 = vshrl.u32 %v208, 7
        %v210 = vsub.s32 0, %v209
        %v211 = vrot.slane %v191, %v210
        %v216 = vcombine.low %v199, %v203
        %v217 = vcombine.low %v207, %v211
        %v220 = vsub.f32 %v146, %v216
        %v221 = vsub.f32 %v147, %v217
        %v222 = vmul.f32 %v220, 1.442695
        %v223 = vpow.pop %v222
        %v224 = vmul.f32 %v221, 1.442695
        %v225 = vpow.pop %v224
        %p226 = scmp.eq.s32.totalorder %s15, 0
        %s227 = scalar_select %p226, 1, 0
        %v228 = vstv %s227
        %vm229 = vcmp.eq.s32.totalorder %v228, 1
        %v230 = vsel %vm229, %v223, 0.0
        %v231 = vsel %vm229, %v225, 0.0
        %v234 = vrot.slane %v223, 5
        %v235 = vrot.slane %v234, 4
        %v236 = vrot.slane %v225, 5
        %v237 = vrot.slane %v236, 4
        %v240 = vadd.f32 %v223, %v235
        %v241 = vadd.f32 %v225, %v237
        %p242 = scmp.eq.s32.totalorder %s15, 1
        %s243 = scalar_select %p242, 1, 0
        %v244 = vstv %s243
        %vm245 = vcmp.eq.s32.totalorder %v244, 1
        %v248 = vrot.slane %v230, 7
        %v249 = vrot.slane %v231, 7
        %v252 = vsel %vm245, %v223, %v248
        %v253 = vsel %vm245, %v225, %v249
        %v254 = vrot.slane %v223, 6
        %v255 = vrot.slane %v254, 4
        %v256 = vrot.slane %v225, 6
        %v257 = vrot.slane %v256, 4
        %v260 = vadd.f32 %v240, %v255
        %v261 = vadd.f32 %v241, %v257
        %p262 = scmp.eq.s32.totalorder %s15, 2
        %s263 = scalar_select %p262, 1, 0
        %v264 = vstv %s263
        %vm265 = vcmp.eq.s32.totalorder %v264, 1
        %v268 = vrot.slane %v252, 7
        %v269 = vrot.slane %v253, 7
        %v272 = vsel %vm265, %v223, %v268
        %v273 = vsel %vm265, %v225, %v269
        %v274 = vrot.slane %v223, 7
        %v275 = vrot.slane %v274, 4
        %v276 = vrot.slane %v225, 7
        %v277 = vrot.slane %v276, 4
        %v280 = vadd.f32 %v260, %v275
        %v281 = vadd.f32 %v261, %v277
        %p282 = scmp.eq.s32.totalorder %s15, 3
        %s283 = scalar_select %p282, 1, 0
        %v284 = vstv %s283
        %vm285 = vcmp.eq.s32.totalorder %v284, 1
        %v288 = vrot.slane %v272, 7
        %v289 = vrot.slane %v273, 7
        %v292 = vsel %vm285, %v223, %v288
        %v293 = vsel %vm285, %v225, %v289
        %v296 = vrot.slane %v280, 5
        %v297 = vrot.slane %v281, 5
        %v300 = vrcp.pop %v296
        %v301 = vmul.f32 %v292, %v300
        %v302 = vrcp.pop %v297
        %v303 = vmul.f32 %v293, %v302
        %v304 = vlaneseq
        %v305 = vand.u32 %v304, 127
        %v306 = vadd.s32 %v305, 128
        %v307 = vadd.s32 %v305, 256
        %v308 = vadd.s32 %v305, 384
        %vm309 = vcmp.lt.s32.totalorder %v305, 512
        %vm310 = vcmp.lt.s32.totalorder %v306, 512
        %vm311 = vcmp.lt.s32.totalorder %v307, 512
        %vm312 = vcmp.lt.s32.totalorder %v308, 512
        %v313 = vld [vmem:[#allocation4] sm:$0xf]
        %v314 = vstv %s15
        %vm315 = vcmp.eq.s32.totalorder %v313, %v314
        %v316 = vsel %vm315, 1.0, 0.0
        %v320 = vunpack.c.l.s4 1966171168
        %v321 = vunpack.c.0.s8 %v320
        %v322 = vlaneseq
        %v323 = vshrl.u32 %v322, 7
        %v324 = vsub.s32 %v321, %v323
        %v325 = vrot.slane %v301, %v324
        %v327 = vunpack.c.l.s4 1966171168
        %v328 = vunpack.c.0.s8 %v327
        %v329 = vlaneseq
        %v330 = vshrl.u32 %v329, 7
        %v331 = vsub.s32 %v328, %v330
        %v332 = vrot.slane %v303, %v331
        %v333 = vcombine.high %v325, %v332
        %v335 = vunpack.c.l.s4 1966171168
        %v336 = vunpack.c.0.s8 %v335
        %v337 = vlaneseq
        %v338 = vshrl.u32 %v337, 7
        %v339 = vsub.s32 %v336, %v338
        %v340 = vrot.slane %v333, %v339
        %v341 = vcombine.high %v340, %v340
        %v343 = vsub.f32 %v316, %v341
        %v344 = vand.u32 2147483647, %v343
        %v346 = vlaneseq
        %v347 = vshrl.u32 %v346, 7
        %v348 = vsub.s32 0, %v347
        %v349 = vrot.slane %v344, %v348
        %v350 = vlaneseq
        %v351 = vshrl.u32 %v350, 7
        %v352 = vsub.s32 1, %v351
        %v353 = vrot.slane %v344, %v352
        %v354 = vlaneseq
        %v355 = vshrl.u32 %v354, 7
        %v356 = vsub.s32 2, %v355
        %v357 = vrot.slane %v344, %v356
        %v358 = vlaneseq
        %v359 = vshrl.u32 %v358, 7
        %v360 = vsub.s32 3, %v359
        %v361 = vrot.slane %v344, %v360
        %v366 = vsel %vm309, %v349, 0.0
        %v367 = vsel %vm310, %v353, 0.0
        %v368 = vsel %vm311, %v357, 0.0
        %v369 = vsel %vm312, %v361, 0.0
        %v370 = vlaneseq
        %v371 = vshrl.u32 %v370, 7
        %v372 = vsub.s32 0, %v371
        %v373 = vrot.slane %v366, %v372
        %v374 = vlaneseq
        %v375 = vshrl.u32 %v374, 7
        %v376 = vsub.s32 0, %v375
        %v377 = vrot.slane %v367, %v376
        %v378 = vlaneseq
        %v379 = vshrl.u32 %v378, 7
        %v380 = vsub.s32 0, %v379
        %v381 = vrot.slane %v368, %v380
        %v382 = vlaneseq
        %v383 = vshrl.u32 %v382, 7
        %v384 = vsub.s32 0, %v383
        %v385 = vrot.slane %v369, %v384
        %386 = vxpose.xlu0.b32.start [1/16] %v373, 128
        %387 = vxpose.xlu0.b32.cont [2/16] 0.0, 128
        %388 = vxpose.xlu0.b32.cont [3/16] 0.0, 128
        %389 = vxpose.xlu0.b32.cont [4/16] 0.0, 128
        %390 = vxpose.xlu0.b32.cont [5/16] 0.0, 128
        %391 = vxpose.xlu0.b32.cont [6/16] 0.0, 128
        %392 = vxpose.xlu0.b32.cont [7/16] 0.0, 128
        %393 = vxpose.xlu0.b32.cont [8/16] 0.0, 128
        %394 = vxpose.xlu0.b32.cont [9/16] 0.0, 128
        %395 = vxpose.xlu0.b32.cont [10/16] 0.0, 128
        %396 = vxpose.xlu0.b32.cont [11/16] 0.0, 128
        %397 = vxpose.xlu0.b32.cont [12/16] 0.0, 128
        %398 = vxpose.xlu0.b32.cont [13/16] 0.0, 128
        %399 = vxpose.xlu0.b32.cont [14/16] 0.0, 128
        %400 = vxpose.xlu0.b32.cont [15/16] 0.0, 128
        %401 = vxpose.xlu0.b32.end [16/16] 0.0, 128
        %v402 = vpop.trf.xlu0
        %v403 = vpop.trf.xlu0
        %v404 = vpop.trf.xlu0
        %v405 = vpop.trf.xlu0
        %v406 = vpop.trf.xlu0
        %v407 = vpop.trf.xlu0
        %v408 = vpop.trf.xlu0
        %v409 = vpop.trf.xlu0
        %v410 = vpop.trf.xlu0
        %v411 = vpop.trf.xlu0
        %v412 = vpop.trf.xlu0
        %v413 = vpop.trf.xlu0
        %v414 = vpop.trf.xlu0
        %v415 = vpop.trf.xlu0
        %v416 = vpop.trf.xlu0
        %v417 = vpop.trf.xlu0
        %418 = vxpose.xlu0.b32.start [1/16] %v377, 128
        %419 = vxpose.xlu0.b32.cont [2/16] 0.0, 128
        %420 = vxpose.xlu0.b32.cont [3/16] 0.0, 128
        %421 = vxpose.xlu0.b32.cont [4/16] 0.0, 128
        %422 = vxpose.xlu0.b32.cont [5/16] 0.0, 128
        %423 = vxpose.xlu0.b32.cont [6/16] 0.0, 128
        %424 = vxpose.xlu0.b32.cont [7/16] 0.0, 128
        %425 = vxpose.xlu0.b32.cont [8/16] 0.0, 128
        %426 = vxpose.xlu0.b32.cont [9/16] 0.0, 128
        %427 = vxpose.xlu0.b32.cont [10/16] 0.0, 128
        %428 = vxpose.xlu0.b32.cont [11/16] 0.0, 128
        %429 = vxpose.xlu0.b32.cont [12/16] 0.0, 128
        %430 = vxpose.xlu0.b32.cont [13/16] 0.0, 128
        %431 = vxpose.xlu0.b32.cont [14/16] 0.0, 128
        %432 = vxpose.xlu0.b32.cont [15/16] 0.0, 128
        %433 = vxpose.xlu0.b32.end [16/16] 0.0, 128
        %v434 = vpop.trf.xlu0
        %v435 = vpop.trf.xlu0
        %v436 = vpop.trf.xlu0
        %v437 = vpop.trf.xlu0
        %v438 = vpop.trf.xlu0
        %v439 = vpop.trf.xlu0
        %v440 = vpop.trf.xlu0
        %v441 = vpop.trf.xlu0
        %v442 = vpop.trf.xlu0
        %v443 = vpop.trf.xlu0
        %v444 = vpop.trf.xlu0
        %v445 = vpop.trf.xlu0
        %v446 = vpop.trf.xlu0
        %v447 = vpop.trf.xlu0
        %v448 = vpop.trf.xlu0
        %v449 = vpop.trf.xlu0
        %450 = vxpose.xlu0.b32.start [1/16] %v381, 128
        %451 = vxpose.xlu0.b32.cont [2/16] 0.0, 128
        %452 = vxpose.xlu0.b32.cont [3/16] 0.0, 128
        %453 = vxpose.xlu0.b32.cont [4/16] 0.0, 128
        %454 = vxpose.xlu0.b32.cont [5/16] 0.0, 128
        %455 = vxpose.xlu0.b32.cont [6/16] 0.0, 128
        %456 = vxpose.xlu0.b32.cont [7/16] 0.0, 128
        %457 = vxpose.xlu0.b32.cont [8/16] 0.0, 128
        %458 = vxpose.xlu0.b32.cont [9/16] 0.0, 128
        %459 = vxpose.xlu0.b32.cont [10/16] 0.0, 128
        %460 = vxpose.xlu0.b32.cont [11/16] 0.0, 128
        %461 = vxpose.xlu0.b32.cont [12/16] 0.0, 128
        %462 = vxpose.xlu0.b32.cont [13/16] 0.0, 128
        %463 = vxpose.xlu0.b32.cont [14/16] 0.0, 128
        %464 = vxpose.xlu0.b32.cont [15/16] 0.0, 128
        %465 = vxpose.xlu0.b32.end [16/16] 0.0, 128
        %v466 = vpop.trf.xlu0
        %v467 = vpop.trf.xlu0
        %v468 = vpop.trf.xlu0
        %v469 = vpop.trf.xlu0
        %v470 = vpop.trf.xlu0
        %v471 = vpop.trf.xlu0
        %v472 = vpop.trf.xlu0
        %v473 = vpop.trf.xlu0
        %v474 = vpop.trf.xlu0
        %v475 = vpop.trf.xlu0
        %v476 = vpop.trf.xlu0
        %v477 = vpop.trf.xlu0
        %v478 = vpop.trf.xlu0
        %v479 = vpop.trf.xlu0
        %v480 = vpop.trf.xlu0
        %v481 = vpop.trf.xlu0
        %482 = vxpose.xlu0.b32.start [1/16] %v385, 128
        %483 = vxpose.xlu0.b32.cont [2/16] 0.0, 128
        %484 = vxpose.xlu0.b32.cont [3/16] 0.0, 128
        %485 = vxpose.xlu0.b32.cont [4/16] 0.0, 128
        %486 = vxpose.xlu0.b32.cont [5/16] 0.0, 128
        %487 = vxpose.xlu0.b32.cont [6/16] 0.0, 128
        %488 = vxpose.xlu0.b32.cont [7/16] 0.0, 128
        %489 = vxpose.xlu0.b32.cont [8/16] 0.0, 128
        %490 = vxpose.xlu0.b32.cont [9/16] 0.0, 128
        %491 = vxpose.xlu0.b32.cont [10/16] 0.0, 128
        %492 = vxpose.xlu0.b32.cont [11/16] 0.0, 128
        %493 = vxpose.xlu0.b32.cont [12/16] 0.0, 128
        %494 = vxpose.xlu0.b32.cont [13/16] 0.0, 128
        %495 = vxpose.xlu0.b32.cont [14/16] 0.0, 128
        %496 = vxpose.xlu0.b32.cont [15/16] 0.0, 128
        %497 = vxpose.xlu0.b32.end [16/16] 0.0, 128
        %v498 = vpop.trf.xlu0
        %v499 = vpop.trf.xlu0
        %v500 = vpop.trf.xlu0
        %v501 = vpop.trf.xlu0
        %v502 = vpop.trf.xlu0
        %v503 = vpop.trf.xlu0
        %v504 = vpop.trf.xlu0
        %v505 = vpop.trf.xlu0
        %v506 = vpop.trf.xlu0
        %v507 = vpop.trf.xlu0
        %v508 = vpop.trf.xlu0
        %v509 = vpop.trf.xlu0
        %v510 = vpop.trf.xlu0
        %v511 = vpop.trf.xlu0
        %v512 = vpop.trf.xlu0
        %v513 = vpop.trf.xlu0
        %v514 = vlaneseq
        %v515 = vshrl.u32 %v514, 7
        %v516 = vadd.s32 %v515, 8
        %v517 = vadd.s32 %v515, 16
        %v518 = vadd.s32 %v515, 24
        %v519 = vadd.s32 %v515, 32
        %v520 = vadd.s32 %v515, 40
        %v521 = vadd.s32 %v515, 48
        %v522 = vadd.s32 %v515, 56
        %v523 = vadd.s32 %v515, 64
        %v524 = vadd.s32 %v515, 72
        %v525 = vadd.s32 %v515, 80
        %v526 = vadd.s32 %v515, 88
        %v527 = vadd.s32 %v515, 96
        %v528 = vadd.s32 %v515, 104
        %v529 = vadd.s32 %v515, 112
        %v530 = vadd.s32 %v515, 120
        %v531 = vadd.s32 %v515, 128
        %v532 = vadd.s32 %v515, 136
        %v533 = vadd.s32 %v515, 144
        %v534 = vadd.s32 %v515, 152
        %v535 = vadd.s32 %v515, 160
        %v536 = vadd.s32 %v515, 168
        %v537 = vadd.s32 %v515, 176
        %v538 = vadd.s32 %v515, 184
        %v539 = vadd.s32 %v515, 192
        %v540 = vadd.s32 %v515, 200
        %v541 = vadd.s32 %v515, 208
        %v542 = vadd.s32 %v515, 216
        %v543 = vadd.s32 %v515, 224
        %v544 = vadd.s32 %v515, 232
        %v545 = vadd.s32 %v515, 240
        %v546 = vadd.s32 %v515, 248
        %v547 = vadd.s32 %v515, 256
        %v548 = vadd.s32 %v515, 264
        %v549 = vadd.s32 %v515, 272
        %v550 = vadd.s32 %v515, 280
        %v551 = vadd.s32 %v515, 288
        %v552 = vadd.s32 %v515, 296
        %v553 = vadd.s32 %v515, 304
        %v554 = vadd.s32 %v515, 312
        %v555 = vadd.s32 %v515, 320
        %v556 = vadd.s32 %v515, 328
        %v557 = vadd.s32 %v515, 336
        %v558 = vadd.s32 %v515, 344
        %v559 = vadd.s32 %v515, 352
        %v560 = vadd.s32 %v515, 360
        %v561 = vadd.s32 %v515, 368
        %v562 = vadd.s32 %v515, 376
        %v563 = vadd.s32 %v515, 384
        %v564 = vadd.s32 %v515, 392
        %v565 = vadd.s32 %v515, 400
        %v566 = vadd.s32 %v515, 408
        %v567 = vadd.s32 %v515, 416
        %v568 = vadd.s32 %v515, 424
        %v569 = vadd.s32 %v515, 432
        %v570 = vadd.s32 %v515, 440
        %v571 = vadd.s32 %v515, 448
        %v572 = vadd.s32 %v515, 456
        %v573 = vadd.s32 %v515, 464
        %v574 = vadd.s32 %v515, 472
        %v575 = vadd.s32 %v515, 480
        %v576 = vadd.s32 %v515, 488
        %v577 = vadd.s32 %v515, 496
        %v578 = vadd.s32 %v515, 504
        %580 = vset.pattern.permute.xlu0 0
        %581 = vperm.xlu0 %580, %v402
        %v582 = vpop.permute.xlu0 %581
        %585 = vset.pattern.permute.xlu0 0
        %586 = vperm.xlu0 %585, %v403
        %v587 = vpop.permute.xlu0 %586
        %590 = vset.pattern.permute.xlu0 0
        %591 = vperm.xlu0 %590, %v404
        %v592 = vpop.permute.xlu0 %591
        %595 = vset.pattern.permute.xlu0 0
        %596 = vperm.xlu0 %595, %v405
        %v597 = vpop.permute.xlu0 %596
        %600 = vset.pattern.permute.xlu0 0
        %601 = vperm.xlu0 %600, %v406
        %v602 = vpop.permute.xlu0 %601
        %605 = vset.pattern.permute.xlu0 0
        %606 = vperm.xlu0 %605, %v407
        %v607 = vpop.permute.xlu0 %606
        %610 = vset.pattern.permute.xlu0 0
        %611 = vperm.xlu0 %610, %v408
        %v612 = vpop.permute.xlu0 %611
        %615 = vset.pattern.permute.xlu0 0
        %616 = vperm.xlu0 %615, %v409
        %v617 = vpop.permute.xlu0 %616
        %620 = vset.pattern.permute.xlu0 0
        %621 = vperm.xlu0 %620, %v410
        %v622 = vpop.permute.xlu0 %621
        %625 = vset.pattern.permute.xlu0 0
        %626 = vperm.xlu0 %625, %v411
        %v627 = vpop.permute.xlu0 %626
        %630 = vset.pattern.permute.xlu0 0
        %631 = vperm.xlu0 %630, %v412
        %v632 = vpop.permute.xlu0 %631
        %635 = vset.pattern.permute.xlu0 0
        %636 = vperm.xlu0 %635, %v413
        %v637 = vpop.permute.xlu0 %636
        %640 = vset.pattern.permute.xlu0 0
        %641 = vperm.xlu0 %640, %v414
        %v642 = vpop.permute.xlu0 %641
        %645 = vset.pattern.permute.xlu0 0
        %646 = vperm.xlu0 %645, %v415
        %v647 = vpop.permute.xlu0 %646
        %650 = vset.pattern.permute.xlu0 0
        %651 = vperm.xlu0 %650, %v416
        %v652 = vpop.permute.xlu0 %651
        %655 = vset.pattern.permute.xlu0 0
        %656 = vperm.xlu0 %655, %v417
        %v657 = vpop.permute.xlu0 %656
        %660 = vset.pattern.permute.xlu0 0
        %661 = vperm.xlu0 %660, %v434
        %v662 = vpop.permute.xlu0 %661
        %665 = vset.pattern.permute.xlu0 0
        %666 = vperm.xlu0 %665, %v435
        %v667 = vpop.permute.xlu0 %666
        %670 = vset.pattern.permute.xlu0 0
        %671 = vperm.xlu0 %670, %v436
        %v672 = vpop.permute.xlu0 %671
        %675 = vset.pattern.permute.xlu0 0
        %676 = vperm.xlu0 %675, %v437
        %v677 = vpop.permute.xlu0 %676
        %680 = vset.pattern.permute.xlu0 0
        %681 = vperm.xlu0 %680, %v438
        %v682 = vpop.permute.xlu0 %681
        %685 = vset.pattern.permute.xlu0 0
        %686 = vperm.xlu0 %685, %v439
        %v687 = vpop.permute.xlu0 %686
        %690 = vset.pattern.permute.xlu0 0
        %691 = vperm.xlu0 %690, %v440
        %v692 = vpop.permute.xlu0 %691
        %695 = vset.pattern.permute.xlu0 0
        %696 = vperm.xlu0 %695, %v441
        %v697 = vpop.permute.xlu0 %696
        %700 = vset.pattern.permute.xlu0 0
        %701 = vperm.xlu0 %700, %v442
        %v702 = vpop.permute.xlu0 %701
        %705 = vset.pattern.permute.xlu0 0
        %706 = vperm.xlu0 %705, %v443
        %v707 = vpop.permute.xlu0 %706
        %710 = vset.pattern.permute.xlu0 0
        %711 = vperm.xlu0 %710, %v444
        %v712 = vpop.permute.xlu0 %711
        %715 = vset.pattern.permute.xlu0 0
        %716 = vperm.xlu0 %715, %v445
        %v717 = vpop.permute.xlu0 %716
        %720 = vset.pattern.permute.xlu0 0
        %721 = vperm.xlu0 %720, %v446
        %v722 = vpop.permute.xlu0 %721
        %725 = vset.pattern.permute.xlu0 0
        %726 = vperm.xlu0 %725, %v447
        %v727 = vpop.permute.xlu0 %726
        %730 = vset.pattern.permute.xlu0 0
        %731 = vperm.xlu0 %730, %v448
        %v732 = vpop.permute.xlu0 %731
        %735 = vset.pattern.permute.xlu0 0
        %736 = vperm.xlu0 %735, %v449
        %v737 = vpop.permute.xlu0 %736
        %740 = vset.pattern.permute.xlu0 0
        %741 = vperm.xlu0 %740, %v466
        %v742 = vpop.permute.xlu0 %741
        %745 = vset.pattern.permute.xlu0 0
        %746 = vperm.xlu0 %745, %v467
        %v747 = vpop.permute.xlu0 %746
        %750 = vset.pattern.permute.xlu0 0
        %751 = vperm.xlu0 %750, %v468
        %v752 = vpop.permute.xlu0 %751
        %755 = vset.pattern.permute.xlu0 0
        %756 = vperm.xlu0 %755, %v469
        %v757 = vpop.permute.xlu0 %756
        %760 = vset.pattern.permute.xlu0 0
        %761 = vperm.xlu0 %760, %v470
        %v762 = vpop.permute.xlu0 %761
        %765 = vset.pattern.permute.xlu0 0
        %766 = vperm.xlu0 %765, %v471
        %v767 = vpop.permute.xlu0 %766
        %770 = vset.pattern.permute.xlu0 0
        %771 = vperm.xlu0 %770, %v472
        %v772 = vpop.permute.xlu0 %771
        %775 = vset.pattern.permute.xlu0 0
        %776 = vperm.xlu0 %775, %v473
        %v777 = vpop.permute.xlu0 %776
        %780 = vset.pattern.permute.xlu0 0
        %781 = vperm.xlu0 %780, %v474
        %v782 = vpop.permute.xlu0 %781
        %785 = vset.pattern.permute.xlu0 0
        %786 = vperm.xlu0 %785, %v475
        %v787 = vpop.permute.xlu0 %786
        %790 = vset.pattern.permute.xlu0 0
        %791 = vperm.xlu0 %790, %v476
        %v792 = vpop.permute.xlu0 %791
        %795 = vset.pattern.permute.xlu0 0
        %796 = vperm.xlu0 %795, %v477
        %v797 = vpop.permute.xlu0 %796
        %800 = vset.pattern.permute.xlu0 0
        %801 = vperm.xlu0 %800, %v478
        %v802 = vpop.permute.xlu0 %801
        %805 = vset.pattern.permute.xlu0 0
        %806 = vperm.xlu0 %805, %v479
        %v807 = vpop.permute.xlu0 %806
        %810 = vset.pattern.permute.xlu0 0
        %811 = vperm.xlu0 %810, %v480
        %v812 = vpop.permute.xlu0 %811
        %815 = vset.pattern.permute.xlu0 0
        %816 = vperm.xlu0 %815, %v481
        %v817 = vpop.permute.xlu0 %816
        %820 = vset.pattern.permute.xlu0 0
        %821 = vperm.xlu0 %820, %v498
        %v822 = vpop.permute.xlu0 %821
        %825 = vset.pattern.permute.xlu0 0
        %826 = vperm.xlu0 %825, %v499
        %v827 = vpop.permute.xlu0 %826
        %830 = vset.pattern.permute.xlu0 0
        %831 = vperm.xlu0 %830, %v500
        %v832 = vpop.permute.xlu0 %831
        %835 = vset.pattern.permute.xlu0 0
        %836 = vperm.xlu0 %835, %v501
        %v837 = vpop.permute.xlu0 %836
        %840 = vset.pattern.permute.xlu0 0
        %841 = vperm.xlu0 %840, %v502
        %v842 = vpop.permute.xlu0 %841
        %845 = vset.pattern.permute.xlu0 0
        %846 = vperm.xlu0 %845, %v503
        %v847 = vpop.permute.xlu0 %846
        %850 = vset.pattern.permute.xlu0 0
        %851 = vperm.xlu0 %850, %v504
        %v852 = vpop.permute.xlu0 %851
        %855 = vset.pattern.permute.xlu0 0
        %856 = vperm.xlu0 %855, %v505
        %v857 = vpop.permute.xlu0 %856
        %860 = vset.pattern.permute.xlu0 0
        %861 = vperm.xlu0 %860, %v506
        %v862 = vpop.permute.xlu0 %861
        %865 = vset.pattern.permute.xlu0 0
        %866 = vperm.xlu0 %865, %v507
        %v867 = vpop.permute.xlu0 %866
        %870 = vset.pattern.permute.xlu0 0
        %871 = vperm.xlu0 %870, %v508
        %v872 = vpop.permute.xlu0 %871
        %875 = vset.pattern.permute.xlu0 0
        %876 = vperm.xlu0 %875, %v509
        %v877 = vpop.permute.xlu0 %876
        %880 = vset.pattern.permute.xlu0 0
        %881 = vperm.xlu0 %880, %v510
        %v882 = vpop.permute.xlu0 %881
        %885 = vset.pattern.permute.xlu0 0
        %886 = vperm.xlu0 %885, %v511
        %v887 = vpop.permute.xlu0 %886
        %890 = vset.pattern.permute.xlu0 0
        %891 = vperm.xlu0 %890, %v512
        %v892 = vpop.permute.xlu0 %891
        %895 = vset.pattern.permute.xlu0 0
        %896 = vperm.xlu0 %895, %v513
        %v897 = vpop.permute.xlu0 %896
        %vm899 = vcmp.gt.f32.partialorder %v582, %v373
        %vm900 = vcmp.gt.f32.partialorder %v582, %v377
        %vm901 = vcmp.gt.f32.partialorder %v582, %v381
        %vm902 = vcmp.gt.f32.partialorder %v582, %v385
        %vm903 = vcmp.gt.f32.partialorder %v587, %v373
        %vm904 = vcmp.gt.f32.partialorder %v587, %v377
        %vm905 = vcmp.gt.f32.partialorder %v587, %v381
        %vm906 = vcmp.gt.f32.partialorder %v587, %v385
        %vm907 = vcmp.gt.f32.partialorder %v592, %v373
        %vm908 = vcmp.gt.f32.partialorder %v592, %v377
        %vm909 = vcmp.gt.f32.partialorder %v592, %v381
        %vm910 = vcmp.gt.f32.partialorder %v592, %v385
        %vm911 = vcmp.gt.f32.partialorder %v597, %v373
        %vm912 = vcmp.gt.f32.partialorder %v597, %v377
        %vm913 = vcmp.gt.f32.partialorder %v597, %v381
        %vm914 = vcmp.gt.f32.partialorder %v597, %v385
        %vm915 = vcmp.gt.f32.partialorder %v602, %v373
        %vm916 = vcmp.gt.f32.partialorder %v602, %v377
        %vm917 = vcmp.gt.f32.partialorder %v602, %v381
        %vm918 = vcmp.gt.f32.partialorder %v602, %v385
        %vm919 = vcmp.gt.f32.partialorder %v607, %v373
        %vm920 = vcmp.gt.f32.partialorder %v607, %v377
        %vm921 = vcmp.gt.f32.partialorder %v607, %v381
        %vm922 = vcmp.gt.f32.partialorder %v607, %v385
        %vm923 = vcmp.gt.f32.partialorder %v612, %v373
        %vm924 = vcmp.gt.f32.partialorder %v612, %v377
        %vm925 = vcmp.gt.f32.partialorder %v612, %v381
        %vm926 = vcmp.gt.f32.partialorder %v612, %v385
        %vm927 = vcmp.gt.f32.partialorder %v617, %v373
        %vm928 = vcmp.gt.f32.partialorder %v617, %v377
        %vm929 = vcmp.gt.f32.partialorder %v617, %v381
        %vm930 = vcmp.gt.f32.partialorder %v617, %v385
        %vm931 = vcmp.gt.f32.partialorder %v622, %v373
        %vm932 = vcmp.gt.f32.partialorder %v622, %v377
        %vm933 = vcmp.gt.f32.partialorder %v622, %v381
        %vm934 = vcmp.gt.f32.partialorder %v622, %v385
        %vm935 = vcmp.gt.f32.partialorder %v627, %v373
        %vm936 = vcmp.gt.f32.partialorder %v627, %v377
        %vm937 = vcmp.gt.f32.partialorder %v627, %v381
        %vm938 = vcmp.gt.f32.partialorder %v627, %v385
        %vm939 = vcmp.gt.f32.partialorder %v632, %v373
        %vm940 = vcmp.gt.f32.partialorder %v632, %v377
        %vm941 = vcmp.gt.f32.partialorder %v632, %v381
        %vm942 = vcmp.gt.f32.partialorder %v632, %v385
        %vm943 = vcmp.gt.f32.partialorder %v637, %v373
        %vm944 = vcmp.gt.f32.partialorder %v637, %v377
        %vm945 = vcmp.gt.f32.partialorder %v637, %v381
        %vm946 = vcmp.gt.f32.partialorder %v637, %v385
        %vm947 = vcmp.gt.f32.partialorder %v642, %v373
        %vm948 = vcmp.gt.f32.partialorder %v642, %v377
        %vm949 = vcmp.gt.f32.partialorder %v642, %v381
        %vm950 = vcmp.gt.f32.partialorder %v642, %v385
        %vm951 = vcmp.gt.f32.partialorder %v647, %v373
        %vm952 = vcmp.gt.f32.partialorder %v647, %v377
        %vm953 = vcmp.gt.f32.partialorder %v647, %v381
        %vm954 = vcmp.gt.f32.partialorder %v647, %v385
        %vm955 = vcmp.gt.f32.partialorder %v652, %v373
        %vm956 = vcmp.gt.f32.partialorder %v652, %v377
        %vm957 = vcmp.gt.f32.partialorder %v652, %v381
        %vm958 = vcmp.gt.f32.partialorder %v652, %v385
        %vm959 = vcmp.gt.f32.partialorder %v657, %v373
        %vm960 = vcmp.gt.f32.partialorder %v657, %v377
        %vm961 = vcmp.gt.f32.partialorder %v657, %v381
        %vm962 = vcmp.gt.f32.partialorder %v657, %v385
        %vm963 = vcmp.gt.f32.partialorder %v662, %v373
        %vm964 = vcmp.gt.f32.partialorder %v662, %v377
        %vm965 = vcmp.gt.f32.partialorder %v662, %v381
        %vm966 = vcmp.gt.f32.partialorder %v662, %v385
        %vm967 = vcmp.gt.f32.partialorder %v667, %v373
        %vm968 = vcmp.gt.f32.partialorder %v667, %v377
        %vm969 = vcmp.gt.f32.partialorder %v667, %v381
        %vm970 = vcmp.gt.f32.partialorder %v667, %v385
        %vm971 = vcmp.gt.f32.partialorder %v672, %v373
        %vm972 = vcmp.gt.f32.partialorder %v672, %v377
        %vm973 = vcmp.gt.f32.partialorder %v672, %v381
        %vm974 = vcmp.gt.f32.partialorder %v672, %v385
        %vm975 = vcmp.gt.f32.partialorder %v677, %v373
        %vm976 = vcmp.gt.f32.partialorder %v677, %v377
        %vm977 = vcmp.gt.f32.partialorder %v677, %v381
        %vm978 = vcmp.gt.f32.partialorder %v677, %v385
        %vm979 = vcmp.gt.f32.partialorder %v682, %v373
        %vm980 = vcmp.gt.f32.partialorder %v682, %v377
        %vm981 = vcmp.gt.f32.partialorder %v682, %v381
        %vm982 = vcmp.gt.f32.partialorder %v682, %v385
        %vm983 = vcmp.gt.f32.partialorder %v687, %v373
        %vm984 = vcmp.gt.f32.partialorder %v687, %v377
        %vm985 = vcmp.gt.f32.partialorder %v687, %v381
        %vm986 = vcmp.gt.f32.partialorder %v687, %v385
        %vm987 = vcmp.gt.f32.partialorder %v692, %v373
        %vm988 = vcmp.gt.f32.partialorder %v692, %v377
        %vm989 = vcmp.gt.f32.partialorder %v692, %v381
        %vm990 = vcmp.gt.f32.partialorder %v692, %v385
        %vm991 = vcmp.gt.f32.partialorder %v697, %v373
        %vm992 = vcmp.gt.f32.partialorder %v697, %v377
        %vm993 = vcmp.gt.f32.partialorder %v697, %v381
        %vm994 = vcmp.gt.f32.partialorder %v697, %v385
        %vm995 = vcmp.gt.f32.partialorder %v702, %v373
        %vm996 = vcmp.gt.f32.partialorder %v702, %v377
        %vm997 = vcmp.gt.f32.partialorder %v702, %v381
        %vm998 = vcmp.gt.f32.partialorder %v702, %v385
        %vm999 = vcmp.gt.f32.partialorder %v707, %v373
        %vm1000 = vcmp.gt.f32.partialorder %v707, %v377
        %vm1001 = vcmp.gt.f32.partialorder %v707, %v381
        %vm1002 = vcmp.gt.f32.partialorder %v707, %v385
        %vm1003 = vcmp.gt.f32.partialorder %v712, %v373
        %vm1004 = vcmp.gt.f32.partialorder %v712, %v377
        %vm1005 = vcmp.gt.f32.partialorder %v712, %v381
        %vm1006 = vcmp.gt.f32.partialorder %v712, %v385
        %vm1007 = vcmp.gt.f32.partialorder %v717, %v373
        %vm1008 = vcmp.gt.f32.partialorder %v717, %v377
        %vm1009 = vcmp.gt.f32.partialorder %v717, %v381
        %vm1010 = vcmp.gt.f32.partialorder %v717, %v385
        %vm1011 = vcmp.gt.f32.partialorder %v722, %v373
        %vm1012 = vcmp.gt.f32.partialorder %v722, %v377
        %vm1013 = vcmp.gt.f32.partialorder %v722, %v381
        %vm1014 = vcmp.gt.f32.partialorder %v722, %v385
        %vm1015 = vcmp.gt.f32.partialorder %v727, %v373
        %vm1016 = vcmp.gt.f32.partialorder %v727, %v377
        %vm1017 = vcmp.gt.f32.partialorder %v727, %v381
        %vm1018 = vcmp.gt.f32.partialorder %v727, %v385
        %vm1019 = vcmp.gt.f32.partialorder %v732, %v373
        %vm1020 = vcmp.gt.f32.partialorder %v732, %v377
        %vm1021 = vcmp.gt.f32.partialorder %v732, %v381
        %vm1022 = vcmp.gt.f32.partialorder %v732, %v385
        %vm1023 = vcmp.gt.f32.partialorder %v737, %v373
        %vm1024 = vcmp.gt.f32.partialorder %v737, %v377
        %vm1025 = vcmp.gt.f32.partialorder %v737, %v381
        %vm1026 = vcmp.gt.f32.partialorder %v737, %v385
        %vm1027 = vcmp.gt.f32.partialorder %v742, %v373
        %vm1028 = vcmp.gt.f32.partialorder %v742, %v377
        %vm1029 = vcmp.gt.f32.partialorder %v742, %v381
        %vm1030 = vcmp.gt.f32.partialorder %v742, %v385
        %vm1031 = vcmp.gt.f32.partialorder %v747, %v373
        %vm1032 = vcmp.gt.f32.partialorder %v747, %v377
        %vm1033 = vcmp.gt.f32.partialorder %v747, %v381
        %vm1034 = vcmp.gt.f32.partialorder %v747, %v385
        %vm1035 = vcmp.gt.f32.partialorder %v752, %v373
        %vm1036 = vcmp.gt.f32.partialorder %v752, %v377
        %vm1037 = vcmp.gt.f32.partialorder %v752, %v381
        %vm1038 = vcmp.gt.f32.partialorder %v752, %v385
        %vm1039 = vcmp.gt.f32.partialorder %v757, %v373
        %vm1040 = vcmp.gt.f32.partialorder %v757, %v377
        %vm1041 = vcmp.gt.f32.partialorder %v757, %v381
        %vm1042 = vcmp.gt.f32.partialorder %v757, %v385
        %vm1043 = vcmp.gt.f32.partialorder %v762, %v373
        %vm1044 = vcmp.gt.f32.partialorder %v762, %v377
        %vm1045 = vcmp.gt.f32.partialorder %v762, %v381
        %vm1046 = vcmp.gt.f32.partialorder %v762, %v385
        %vm1047 = vcmp.gt.f32.partialorder %v767, %v373
        %vm1048 = vcmp.gt.f32.partialorder %v767, %v377
        %vm1049 = vcmp.gt.f32.partialorder %v767, %v381
        %vm1050 = vcmp.gt.f32.partialorder %v767, %v385
        %vm1051 = vcmp.gt.f32.partialorder %v772, %v373
        %vm1052 = vcmp.gt.f32.partialorder %v772, %v377
        %vm1053 = vcmp.gt.f32.partialorder %v772, %v381
        %vm1054 = vcmp.gt.f32.partialorder %v772, %v385
        %vm1055 = vcmp.gt.f32.partialorder %v777, %v373
        %vm1056 = vcmp.gt.f32.partialorder %v777, %v377
        %vm1057 = vcmp.gt.f32.partialorder %v777, %v381
        %vm1058 = vcmp.gt.f32.partialorder %v777, %v385
        %vm1059 = vcmp.gt.f32.partialorder %v782, %v373
        %vm1060 = vcmp.gt.f32.partialorder %v782, %v377
        %vm1061 = vcmp.gt.f32.partialorder %v782, %v381
        %vm1062 = vcmp.gt.f32.partialorder %v782, %v385
        %vm1063 = vcmp.gt.f32.partialorder %v787, %v373
        %vm1064 = vcmp.gt.f32.partialorder %v787, %v377
        %vm1065 = vcmp.gt.f32.partialorder %v787, %v381
        %vm1066 = vcmp.gt.f32.partialorder %v787, %v385
        %vm1067 = vcmp.gt.f32.partialorder %v792, %v373
        %vm1068 = vcmp.gt.f32.partialorder %v792, %v377
        %vm1069 = vcmp.gt.f32.partialorder %v792, %v381
        %vm1070 = vcmp.gt.f32.partialorder %v792, %v385
        %vm1071 = vcmp.gt.f32.partialorder %v797, %v373
        %vm1072 = vcmp.gt.f32.partialorder %v797, %v377
        %vm1073 = vcmp.gt.f32.partialorder %v797, %v381
        %vm1074 = vcmp.gt.f32.partialorder %v797, %v385
        %vm1075 = vcmp.gt.f32.partialorder %v802, %v373
        %vm1076 = vcmp.gt.f32.partialorder %v802, %v377
        %vm1077 = vcmp.gt.f32.partialorder %v802, %v381
        %vm1078 = vcmp.gt.f32.partialorder %v802, %v385
        %vm1079 = vcmp.gt.f32.partialorder %v807, %v373
        %vm1080 = vcmp.gt.f32.partialorder %v807, %v377
        %vm1081 = vcmp.gt.f32.partialorder %v807, %v381
        %vm1082 = vcmp.gt.f32.partialorder %v807, %v385
        %vm1083 = vcmp.gt.f32.partialorder %v812, %v373
        %vm1084 = vcmp.gt.f32.partialorder %v812, %v377
        %vm1085 = vcmp.gt.f32.partialorder %v812, %v381
        %vm1086 = vcmp.gt.f32.partialorder %v812, %v385
        %vm1087 = vcmp.gt.f32.partialorder %v817, %v373
        %vm1088 = vcmp.gt.f32.partialorder %v817, %v377
        %vm1089 = vcmp.gt.f32.partialorder %v817, %v381
        %vm1090 = vcmp.gt.f32.partialorder %v817, %v385
        %vm1091 = vcmp.gt.f32.partialorder %v822, %v373
        %vm1092 = vcmp.gt.f32.partialorder %v822, %v377
        %vm1093 = vcmp.gt.f32.partialorder %v822, %v381
        %vm1094 = vcmp.gt.f32.partialorder %v822, %v385
        %vm1095 = vcmp.gt.f32.partialorder %v827, %v373
        %vm1096 = vcmp.gt.f32.partialorder %v827, %v377
        %vm1097 = vcmp.gt.f32.partialorder %v827, %v381
        %vm1098 = vcmp.gt.f32.partialorder %v827, %v385
        %vm1099 = vcmp.gt.f32.partialorder %v832, %v373
        %vm1100 = vcmp.gt.f32.partialorder %v832, %v377
        %vm1101 = vcmp.gt.f32.partialorder %v832, %v381
        %vm1102 = vcmp.gt.f32.partialorder %v832, %v385
        %vm1103 = vcmp.gt.f32.partialorder %v837, %v373
        %vm1104 = vcmp.gt.f32.partialorder %v837, %v377
        %vm1105 = vcmp.gt.f32.partialorder %v837, %v381
        %vm1106 = vcmp.gt.f32.partialorder %v837, %v385
        %vm1107 = vcmp.gt.f32.partialorder %v842, %v373
        %vm1108 = vcmp.gt.f32.partialorder %v842, %v377
        %vm1109 = vcmp.gt.f32.partialorder %v842, %v381
        %vm1110 = vcmp.gt.f32.partialorder %v842, %v385
        %vm1111 = vcmp.gt.f32.partialorder %v847, %v373
        %vm1112 = vcmp.gt.f32.partialorder %v847, %v377
        %vm1113 = vcmp.gt.f32.partialorder %v847, %v381
        %vm1114 = vcmp.gt.f32.partialorder %v847, %v385
        %vm1115 = vcmp.gt.f32.partialorder %v852, %v373
        %vm1116 = vcmp.gt.f32.partialorder %v852, %v377
        %vm1117 = vcmp.gt.f32.partialorder %v852, %v381
        %vm1118 = vcmp.gt.f32.partialorder %v852, %v385
        %vm1119 = vcmp.gt.f32.partialorder %v857, %v373
        %vm1120 = vcmp.gt.f32.partialorder %v857, %v377
        %vm1121 = vcmp.gt.f32.partialorder %v857, %v381
        %vm1122 = vcmp.gt.f32.partialorder %v857, %v385
        %vm1123 = vcmp.gt.f32.partialorder %v862, %v373
        %vm1124 = vcmp.gt.f32.partialorder %v862, %v377
        %vm1125 = vcmp.gt.f32.partialorder %v862, %v381
        %vm1126 = vcmp.gt.f32.partialorder %v862, %v385
        %vm1127 = vcmp.gt.f32.partialorder %v867, %v373
        %vm1128 = vcmp.gt.f32.partialorder %v867, %v377
        %vm1129 = vcmp.gt.f32.partialorder %v867, %v381
        %vm1130 = vcmp.gt.f32.partialorder %v867, %v385
        %vm1131 = vcmp.gt.f32.partialorder %v872, %v373
        %vm1132 = vcmp.gt.f32.partialorder %v872, %v377
        %vm1133 = vcmp.gt.f32.partialorder %v872, %v381
        %vm1134 = vcmp.gt.f32.partialorder %v872, %v385
        %vm1135 = vcmp.gt.f32.partialorder %v877, %v373
        %vm1136 = vcmp.gt.f32.partialorder %v877, %v377
        %vm1137 = vcmp.gt.f32.partialorder %v877, %v381
        %vm1138 = vcmp.gt.f32.partialorder %v877, %v385
        %vm1139 = vcmp.gt.f32.partialorder %v882, %v373
        %vm1140 = vcmp.gt.f32.partialorder %v882, %v377
        %vm1141 = vcmp.gt.f32.partialorder %v882, %v381
        %vm1142 = vcmp.gt.f32.partialorder %v882, %v385
        %vm1143 = vcmp.gt.f32.partialorder %v887, %v373
        %vm1144 = vcmp.gt.f32.partialorder %v887, %v377
        %vm1145 = vcmp.gt.f32.partialorder %v887, %v381
        %vm1146 = vcmp.gt.f32.partialorder %v887, %v385
        %vm1147 = vcmp.gt.f32.partialorder %v892, %v373
        %vm1148 = vcmp.gt.f32.partialorder %v892, %v377
        %vm1149 = vcmp.gt.f32.partialorder %v892, %v381
        %vm1150 = vcmp.gt.f32.partialorder %v892, %v385
        %vm1151 = vcmp.gt.f32.partialorder %v897, %v373
        %vm1152 = vcmp.gt.f32.partialorder %v897, %v377
        %vm1153 = vcmp.gt.f32.partialorder %v897, %v381
        %vm1154 = vcmp.gt.f32.partialorder %v897, %v385
        %vm1155 = vcmp.eq.f32.partialorder %v582, %v373
        %vm1156 = vcmp.eq.f32.partialorder %v582, %v377
        %vm1157 = vcmp.eq.f32.partialorder %v582, %v381
        %vm1158 = vcmp.eq.f32.partialorder %v582, %v385
        %vm1159 = vcmp.eq.f32.partialorder %v587, %v373
        %vm1160 = vcmp.eq.f32.partialorder %v587, %v377
        %vm1161 = vcmp.eq.f32.partialorder %v587, %v381
        %vm1162 = vcmp.eq.f32.partialorder %v587, %v385
        %vm1163 = vcmp.eq.f32.partialorder %v592, %v373
        %vm1164 = vcmp.eq.f32.partialorder %v592, %v377
        %vm1165 = vcmp.eq.f32.partialorder %v592, %v381
        %vm1166 = vcmp.eq.f32.partialorder %v592, %v385
        %vm1167 = vcmp.eq.f32.partialorder %v597, %v373
        %vm1168 = vcmp.eq.f32.partialorder %v597, %v377
        %vm1169 = vcmp.eq.f32.partialorder %v597, %v381
        %vm1170 = vcmp.eq.f32.partialorder %v597, %v385
        %vm1171 = vcmp.eq.f32.partialorder %v602, %v373
        %vm1172 = vcmp.eq.f32.partialorder %v602, %v377
        %vm1173 = vcmp.eq.f32.partialorder %v602, %v381
        %vm1174 = vcmp.eq.f32.partialorder %v602, %v385
        %vm1175 = vcmp.eq.f32.partialorder %v607, %v373
        %vm1176 = vcmp.eq.f32.partialorder %v607, %v377
        %vm1177 = vcmp.eq.f32.partialorder %v607, %v381
        %vm1178 = vcmp.eq.f32.partialorder %v607, %v385
        %vm1179 = vcmp.eq.f32.partialorder %v612, %v373
        %vm1180 = vcmp.eq.f32.partialorder %v612, %v377
        %vm1181 = vcmp.eq.f32.partialorder %v612, %v381
        %vm1182 = vcmp.eq.f32.partialorder %v612, %v385
        %vm1183 = vcmp.eq.f32.partialorder %v617, %v373
        %vm1184 = vcmp.eq.f32.partialorder %v617, %v377
        %vm1185 = vcmp.eq.f32.partialorder %v617, %v381
        %vm1186 = vcmp.eq.f32.partialorder %v617, %v385
        %vm1187 = vcmp.eq.f32.partialorder %v622, %v373
        %vm1188 = vcmp.eq.f32.partialorder %v622, %v377
        %vm1189 = vcmp.eq.f32.partialorder %v622, %v381
        %vm1190 = vcmp.eq.f32.partialorder %v622, %v385
        %vm1191 = vcmp.eq.f32.partialorder %v627, %v373
        %vm1192 = vcmp.eq.f32.partialorder %v627, %v377
        %vm1193 = vcmp.eq.f32.partialorder %v627, %v381
        %vm1194 = vcmp.eq.f32.partialorder %v627, %v385
        %vm1195 = vcmp.eq.f32.partialorder %v632, %v373
        %vm1196 = vcmp.eq.f32.partialorder %v632, %v377
        %vm1197 = vcmp.eq.f32.partialorder %v632, %v381
        %vm1198 = vcmp.eq.f32.partialorder %v632, %v385
        %vm1199 = vcmp.eq.f32.partialorder %v637, %v373
        %vm1200 = vcmp.eq.f32.partialorder %v637, %v377
        %vm1201 = vcmp.eq.f32.partialorder %v637, %v381
        %vm1202 = vcmp.eq.f32.partialorder %v637, %v385
        %vm1203 = vcmp.eq.f32.partialorder %v642, %v373
        %vm1204 = vcmp.eq.f32.partialorder %v642, %v377
        %vm1205 = vcmp.eq.f32.partialorder %v642, %v381
        %vm1206 = vcmp.eq.f32.partialorder %v642, %v385
        %vm1207 = vcmp.eq.f32.partialorder %v647, %v373
        %vm1208 = vcmp.eq.f32.partialorder %v647, %v377
        %vm1209 = vcmp.eq.f32.partialorder %v647, %v381
        %vm1210 = vcmp.eq.f32.partialorder %v647, %v385
        %vm1211 = vcmp.eq.f32.partialorder %v652, %v373
        %vm1212 = vcmp.eq.f32.partialorder %v652, %v377
        %vm1213 = vcmp.eq.f32.partialorder %v652, %v381
        %vm1214 = vcmp.eq.f32.partialorder %v652, %v385
        %vm1215 = vcmp.eq.f32.partialorder %v657, %v373
        %vm1216 = vcmp.eq.f32.partialorder %v657, %v377
        %vm1217 = vcmp.eq.f32.partialorder %v657, %v381
        %vm1218 = vcmp.eq.f32.partialorder %v657, %v385
        %vm1219 = vcmp.eq.f32.partialorder %v662, %v373
        %vm1220 = vcmp.eq.f32.partialorder %v662, %v377
        %vm1221 = vcmp.eq.f32.partialorder %v662, %v381
        %vm1222 = vcmp.eq.f32.partialorder %v662, %v385
        %vm1223 = vcmp.eq.f32.partialorder %v667, %v373
        %vm1224 = vcmp.eq.f32.partialorder %v667, %v377
        %vm1225 = vcmp.eq.f32.partialorder %v667, %v381
        %vm1226 = vcmp.eq.f32.partialorder %v667, %v385
        %vm1227 = vcmp.eq.f32.partialorder %v672, %v373
        %vm1228 = vcmp.eq.f32.partialorder %v672, %v377
        %vm1229 = vcmp.eq.f32.partialorder %v672, %v381
        %vm1230 = vcmp.eq.f32.partialorder %v672, %v385
        %vm1231 = vcmp.eq.f32.partialorder %v677, %v373
        %vm1232 = vcmp.eq.f32.partialorder %v677, %v377
        %vm1233 = vcmp.eq.f32.partialorder %v677, %v381
        %vm1234 = vcmp.eq.f32.partialorder %v677, %v385
        %vm1235 = vcmp.eq.f32.partialorder %v682, %v373
        %vm1236 = vcmp.eq.f32.partialorder %v682, %v377
        %vm1237 = vcmp.eq.f32.partialorder %v682, %v381
        %vm1238 = vcmp.eq.f32.partialorder %v682, %v385
        %vm1239 = vcmp.eq.f32.partialorder %v687, %v373
        %vm1240 = vcmp.eq.f32.partialorder %v687, %v377
        %vm1241 = vcmp.eq.f32.partialorder %v687, %v381
        %vm1242 = vcmp.eq.f32.partialorder %v687, %v385
        %vm1243 = vcmp.eq.f32.partialorder %v692, %v373
        %vm1244 = vcmp.eq.f32.partialorder %v692, %v377
        %vm1245 = vcmp.eq.f32.partialorder %v692, %v381
        %vm1246 = vcmp.eq.f32.partialorder %v692, %v385
        %vm1247 = vcmp.eq.f32.partialorder %v697, %v373
        %vm1248 = vcmp.eq.f32.partialorder %v697, %v377
        %vm1249 = vcmp.eq.f32.partialorder %v697, %v381
        %vm1250 = vcmp.eq.f32.partialorder %v697, %v385
        %vm1251 = vcmp.eq.f32.partialorder %v702, %v373
        %vm1252 = vcmp.eq.f32.partialorder %v702, %v377
        %vm1253 = vcmp.eq.f32.partialorder %v702, %v381
        %vm1254 = vcmp.eq.f32.partialorder %v702, %v385
        %vm1255 = vcmp.eq.f32.partialorder %v707, %v373
        %vm1256 = vcmp.eq.f32.partialorder %v707, %v377
        %vm1257 = vcmp.eq.f32.partialorder %v707, %v381
        %vm1258 = vcmp.eq.f32.partialorder %v707, %v385
        %vm1259 = vcmp.eq.f32.partialorder %v712, %v373
        %vm1260 = vcmp.eq.f32.partialorder %v712, %v377
        %vm1261 = vcmp.eq.f32.partialorder %v712, %v381
        %vm1262 = vcmp.eq.f32.partialorder %v712, %v385
        %vm1263 = vcmp.eq.f32.partialorder %v717, %v373
        %vm1264 = vcmp.eq.f32.partialorder %v717, %v377
        %vm1265 = vcmp.eq.f32.partialorder %v717, %v381
        %vm1266 = vcmp.eq.f32.partialorder %v717, %v385
        %vm1267 = vcmp.eq.f32.partialorder %v722, %v373
        %vm1268 = vcmp.eq.f32.partialorder %v722, %v377
        %vm1269 = vcmp.eq.f32.partialorder %v722, %v381
        %vm1270 = vcmp.eq.f32.partialorder %v722, %v385
        %vm1271 = vcmp.eq.f32.partialorder %v727, %v373
        %vm1272 = vcmp.eq.f32.partialorder %v727, %v377
        %vm1273 = vcmp.eq.f32.partialorder %v727, %v381
        %vm1274 = vcmp.eq.f32.partialorder %v727, %v385
        %vm1275 = vcmp.eq.f32.partialorder %v732, %v373
        %vm1276 = vcmp.eq.f32.partialorder %v732, %v377
        %vm1277 = vcmp.eq.f32.partialorder %v732, %v381
        %vm1278 = vcmp.eq.f32.partialorder %v732, %v385
        %vm1279 = vcmp.eq.f32.partialorder %v737, %v373
        %vm1280 = vcmp.eq.f32.partialorder %v737, %v377
        %vm1281 = vcmp.eq.f32.partialorder %v737, %v381
        %vm1282 = vcmp.eq.f32.partialorder %v737, %v385
        %vm1283 = vcmp.eq.f32.partialorder %v742, %v373
        %vm1284 = vcmp.eq.f32.partialorder %v742, %v377
        %vm1285 = vcmp.eq.f32.partialorder %v742, %v381
        %vm1286 = vcmp.eq.f32.partialorder %v742, %v385
        %vm1287 = vcmp.eq.f32.partialorder %v747, %v373
        %vm1288 = vcmp.eq.f32.partialorder %v747, %v377
        %vm1289 = vcmp.eq.f32.partialorder %v747, %v381
        %vm1290 = vcmp.eq.f32.partialorder %v747, %v385
        %vm1291 = vcmp.eq.f32.partialorder %v752, %v373
        %vm1292 = vcmp.eq.f32.partialorder %v752, %v377
        %vm1293 = vcmp.eq.f32.partialorder %v752, %v381
        %vm1294 = vcmp.eq.f32.partialorder %v752, %v385
        %vm1295 = vcmp.eq.f32.partialorder %v757, %v373
        %vm1296 = vcmp.eq.f32.partialorder %v757, %v377
        %vm1297 = vcmp.eq.f32.partialorder %v757, %v381
        %vm1298 = vcmp.eq.f32.partialorder %v757, %v385
        %vm1299 = vcmp.eq.f32.partialorder %v762, %v373
        %vm1300 = vcmp.eq.f32.partialorder %v762, %v377
        %vm1301 = vcmp.eq.f32.partialorder %v762, %v381
        %vm1302 = vcmp.eq.f32.partialorder %v762, %v385
        %vm1303 = vcmp.eq.f32.partialorder %v767, %v373
        %vm1304 = vcmp.eq.f32.partialorder %v767, %v377
        %vm1305 = vcmp.eq.f32.partialorder %v767, %v381
        %vm1306 = vcmp.eq.f32.partialorder %v767, %v385
        %vm1307 = vcmp.eq.f32.partialorder %v772, %v373
        %vm1308 = vcmp.eq.f32.partialorder %v772, %v377
        %vm1309 = vcmp.eq.f32.partialorder %v772, %v381
        %vm1310 = vcmp.eq.f32.partialorder %v772, %v385
        %vm1311 = vcmp.eq.f32.partialorder %v777, %v373
        %vm1312 = vcmp.eq.f32.partialorder %v777, %v377
        %vm1313 = vcmp.eq.f32.partialorder %v777, %v381
        %vm1314 = vcmp.eq.f32.partialorder %v777, %v385
        %vm1315 = vcmp.eq.f32.partialorder %v782, %v373
        %vm1316 = vcmp.eq.f32.partialorder %v782, %v377
        %vm1317 = vcmp.eq.f32.partialorder %v782, %v381
        %vm1318 = vcmp.eq.f32.partialorder %v782, %v385
        %vm1319 = vcmp.eq.f32.partialorder %v787, %v373
        %vm1320 = vcmp.eq.f32.partialorder %v787, %v377
        %vm1321 = vcmp.eq.f32.partialorder %v787, %v381
        %vm1322 = vcmp.eq.f32.partialorder %v787, %v385
        %vm1323 = vcmp.eq.f32.partialorder %v792, %v373
        %vm1324 = vcmp.eq.f32.partialorder %v792, %v377
        %vm1325 = vcmp.eq.f32.partialorder %v792, %v381
        %vm1326 = vcmp.eq.f32.partialorder %v792, %v385
        %vm1327 = vcmp.eq.f32.partialorder %v797, %v373
        %vm1328 = vcmp.eq.f32.partialorder %v797, %v377
        %vm1329 = vcmp.eq.f32.partialorder %v797, %v381
        %vm1330 = vcmp.eq.f32.partialorder %v797, %v385
        %vm1331 = vcmp.eq.f32.partialorder %v802, %v373
        %vm1332 = vcmp.eq.f32.partialorder %v802, %v377
        %vm1333 = vcmp.eq.f32.partialorder %v802, %v381
        %vm1334 = vcmp.eq.f32.partialorder %v802, %v385
        %vm1335 = vcmp.eq.f32.partialorder %v807, %v373
        %vm1336 = vcmp.eq.f32.partialorder %v807, %v377
        %vm1337 = vcmp.eq.f32.partialorder %v807, %v381
        %vm1338 = vcmp.eq.f32.partialorder %v807, %v385
        %vm1339 = vcmp.eq.f32.partialorder %v812, %v373
        %vm1340 = vcmp.eq.f32.partialorder %v812, %v377
        %vm1341 = vcmp.eq.f32.partialorder %v812, %v381
        %vm1342 = vcmp.eq.f32.partialorder %v812, %v385
        %vm1343 = vcmp.eq.f32.partialorder %v817, %v373
        %vm1344 = vcmp.eq.f32.partialorder %v817, %v377
        %vm1345 = vcmp.eq.f32.partialorder %v817, %v381
        %vm1346 = vcmp.eq.f32.partialorder %v817, %v385
        %vm1347 = vcmp.eq.f32.partialorder %v822, %v373
        %vm1348 = vcmp.eq.f32.partialorder %v822, %v377
        %vm1349 = vcmp.eq.f32.partialorder %v822, %v381
        %vm1350 = vcmp.eq.f32.partialorder %v822, %v385
        %vm1351 = vcmp.eq.f32.partialorder %v827, %v373
        %vm1352 = vcmp.eq.f32.partialorder %v827, %v377
        %vm1353 = vcmp.eq.f32.partialorder %v827, %v381
        %vm1354 = vcmp.eq.f32.partialorder %v827, %v385
        %vm1355 = vcmp.eq.f32.partialorder %v832, %v373
        %vm1356 = vcmp.eq.f32.partialorder %v832, %v377
        %vm1357 = vcmp.eq.f32.partialorder %v832, %v381
        %vm1358 = vcmp.eq.f32.partialorder %v832, %v385
        %vm1359 = vcmp.eq.f32.partialorder %v837, %v373
        %vm1360 = vcmp.eq.f32.partialorder %v837, %v377
        %vm1361 = vcmp.eq.f32.partialorder %v837, %v381
        %vm1362 = vcmp.eq.f32.partialorder %v837, %v385
        %vm1363 = vcmp.eq.f32.partialorder %v842, %v373
        %vm1364 = vcmp.eq.f32.partialorder %v842, %v377
        %vm1365 = vcmp.eq.f32.partialorder %v842, %v381
        %vm1366 = vcmp.eq.f32.partialorder %v842, %v385
        %vm1367 = vcmp.eq.f32.partialorder %v847, %v373
        %vm1368 = vcmp.eq.f32.partialorder %v847, %v377
        %vm1369 = vcmp.eq.f32.partialorder %v847, %v381
        %vm1370 = vcmp.eq.f32.partialorder %v847, %v385
        %vm1371 = vcmp.eq.f32.partialorder %v852, %v373
        %vm1372 = vcmp.eq.f32.partialorder %v852, %v377
        %vm1373 = vcmp.eq.f32.partialorder %v852, %v381
        %vm1374 = vcmp.eq.f32.partialorder %v852, %v385
        %vm1375 = vcmp.eq.f32.partialorder %v857, %v373
        %vm1376 = vcmp.eq.f32.partialorder %v857, %v377
        %vm1377 = vcmp.eq.f32.partialorder %v857, %v381
        %vm1378 = vcmp.eq.f32.partialorder %v857, %v385
        %vm1379 = vcmp.eq.f32.partialorder %v862, %v373
        %vm1380 = vcmp.eq.f32.partialorder %v862, %v377
        %vm1381 = vcmp.eq.f32.partialorder %v862, %v381
        %vm1382 = vcmp.eq.f32.partialorder %v862, %v385
        %vm1383 = vcmp.eq.f32.partialorder %v867, %v373
        %vm1384 = vcmp.eq.f32.partialorder %v867, %v377
        %vm1385 = vcmp.eq.f32.partialorder %v867, %v381
        %vm1386 = vcmp.eq.f32.partialorder %v867, %v385
        %vm1387 = vcmp.eq.f32.partialorder %v872, %v373
        %vm1388 = vcmp.eq.f32.partialorder %v872, %v377
        %vm1389 = vcmp.eq.f32.partialorder %v872, %v381
        %vm1390 = vcmp.eq.f32.partialorder %v872, %v385
        %vm1391 = vcmp.eq.f32.partialorder %v877, %v373
        %vm1392 = vcmp.eq.f32.partialorder %v877, %v377
        %vm1393 = vcmp.eq.f32.partialorder %v877, %v381
        %vm1394 = vcmp.eq.f32.partialorder %v877, %v385
        %vm1395 = vcmp.eq.f32.partialorder %v882, %v373
        %vm1396 = vcmp.eq.f32.partialorder %v882, %v377
        %vm1397 = vcmp.eq.f32.partialorder %v882, %v381
        %vm1398 = vcmp.eq.f32.partialorder %v882, %v385
        %vm1399 = vcmp.eq.f32.partialorder %v887, %v373
        %vm1400 = vcmp.eq.f32.partialorder %v887, %v377
        %vm1401 = vcmp.eq.f32.partialorder %v887, %v381
        %vm1402 = vcmp.eq.f32.partialorder %v887, %v385
        %vm1403 = vcmp.eq.f32.partialorder %v892, %v373
        %vm1404 = vcmp.eq.f32.partialorder %v892, %v377
        %vm1405 = vcmp.eq.f32.partialorder %v892, %v381
        %vm1406 = vcmp.eq.f32.partialorder %v892, %v385
        %vm1407 = vcmp.eq.f32.partialorder %v897, %v373
        %vm1408 = vcmp.eq.f32.partialorder %v897, %v377
        %vm1409 = vcmp.eq.f32.partialorder %v897, %v381
        %vm1410 = vcmp.eq.f32.partialorder %v897, %v385
        %vm1411 = vcmp.lt.s32.totalorder %v515, %v305
        %vm1412 = vcmp.lt.s32.totalorder %v515, %v306
        %vm1413 = vcmp.lt.s32.totalorder %v515, %v307
        %vm1414 = vcmp.lt.s32.totalorder %v515, %v308
        %vm1415 = vcmp.lt.s32.totalorder %v516, %v305
        %vm1416 = vcmp.lt.s32.totalorder %v516, %v306
        %vm1417 = vcmp.lt.s32.totalorder %v516, %v307
        %vm1418 = vcmp.lt.s32.totalorder %v516, %v308
        %vm1419 = vcmp.lt.s32.totalorder %v517, %v305
        %vm1420 = vcmp.lt.s32.totalorder %v517, %v306
        %vm1421 = vcmp.lt.s32.totalorder %v517, %v307
        %vm1422 = vcmp.lt.s32.totalorder %v517, %v308
        %vm1423 = vcmp.lt.s32.totalorder %v518, %v305
        %vm1424 = vcmp.lt.s32.totalorder %v518, %v306
        %vm1425 = vcmp.lt.s32.totalorder %v518, %v307
        %vm1426 = vcmp.lt.s32.totalorder %v518, %v308
        %vm1427 = vcmp.lt.s32.totalorder %v519, %v305
        %vm1428 = vcmp.lt.s32.totalorder %v519, %v306
        %vm1429 = vcmp.lt.s32.totalorder %v519, %v307
        %vm1430 = vcmp.lt.s32.totalorder %v519, %v308
        %vm1431 = vcmp.lt.s32.totalorder %v520, %v305
        %vm1432 = vcmp.lt.s32.totalorder %v520, %v306
        %vm1433 = vcmp.lt.s32.totalorder %v520, %v307
        %vm1434 = vcmp.lt.s32.totalorder %v520, %v308
        %vm1435 = vcmp.lt.s32.totalorder %v521, %v305
        %vm1436 = vcmp.lt.s32.totalorder %v521, %v306
        %vm1437 = vcmp.lt.s32.totalorder %v521, %v307
        %vm1438 = vcmp.lt.s32.totalorder %v521, %v308
        %vm1439 = vcmp.lt.s32.totalorder %v522, %v305
        %vm1440 = vcmp.lt.s32.totalorder %v522, %v306
        %vm1441 = vcmp.lt.s32.totalorder %v522, %v307
        %vm1442 = vcmp.lt.s32.totalorder %v522, %v308
        %vm1443 = vcmp.lt.s32.totalorder %v523, %v305
        %vm1444 = vcmp.lt.s32.totalorder %v523, %v306
        %vm1445 = vcmp.lt.s32.totalorder %v523, %v307
        %vm1446 = vcmp.lt.s32.totalorder %v523, %v308
        %vm1447 = vcmp.lt.s32.totalorder %v524, %v305
        %vm1448 = vcmp.lt.s32.totalorder %v524, %v306
        %vm1449 = vcmp.lt.s32.totalorder %v524, %v307
        %vm1450 = vcmp.lt.s32.totalorder %v524, %v308
        %vm1451 = vcmp.lt.s32.totalorder %v525, %v305
        %vm1452 = vcmp.lt.s32.totalorder %v525, %v306
        %vm1453 = vcmp.lt.s32.totalorder %v525, %v307
        %vm1454 = vcmp.lt.s32.totalorder %v525, %v308
        %vm1455 = vcmp.lt.s32.totalorder %v526, %v305
        %vm1456 = vcmp.lt.s32.totalorder %v526, %v306
        %vm1457 = vcmp.lt.s32.totalorder %v526, %v307
        %vm1458 = vcmp.lt.s32.totalorder %v526, %v308
        %vm1459 = vcmp.lt.s32.totalorder %v527, %v305
        %vm1460 = vcmp.lt.s32.totalorder %v527, %v306
        %vm1461 = vcmp.lt.s32.totalorder %v527, %v307
        %vm1462 = vcmp.lt.s32.totalorder %v527, %v308
        %vm1463 = vcmp.lt.s32.totalorder %v528, %v305
        %vm1464 = vcmp.lt.s32.totalorder %v528, %v306
        %vm1465 = vcmp.lt.s32.totalorder %v528, %v307
        %vm1466 = vcmp.lt.s32.totalorder %v528, %v308
        %vm1467 = vcmp.lt.s32.totalorder %v529, %v305
        %vm1468 = vcmp.lt.s32.totalorder %v529, %v306
        %vm1469 = vcmp.lt.s32.totalorder %v529, %v307
        %vm1470 = vcmp.lt.s32.totalorder %v529, %v308
        %vm1471 = vcmp.lt.s32.totalorder %v530, %v305
        %vm1472 = vcmp.lt.s32.totalorder %v530, %v306
        %vm1473 = vcmp.lt.s32.totalorder %v530, %v307
        %vm1474 = vcmp.lt.s32.totalorder %v530, %v308
        %vm1475 = vcmp.lt.s32.totalorder %v531, %v305
        %vm1476 = vcmp.lt.s32.totalorder %v531, %v306
        %vm1477 = vcmp.lt.s32.totalorder %v531, %v307
        %vm1478 = vcmp.lt.s32.totalorder %v531, %v308
        %vm1479 = vcmp.lt.s32.totalorder %v532, %v305
        %vm1480 = vcmp.lt.s32.totalorder %v532, %v306
        %vm1481 = vcmp.lt.s32.totalorder %v532, %v307
        %vm1482 = vcmp.lt.s32.totalorder %v532, %v308
        %vm1483 = vcmp.lt.s32.totalorder %v533, %v305
        %vm1484 = vcmp.lt.s32.totalorder %v533, %v306
        %vm1485 = vcmp.lt.s32.totalorder %v533, %v307
        %vm1486 = vcmp.lt.s32.totalorder %v533, %v308
        %vm1487 = vcmp.lt.s32.totalorder %v534, %v305
        %vm1488 = vcmp.lt.s32.totalorder %v534, %v306
        %vm1489 = vcmp.lt.s32.totalorder %v534, %v307
        %vm1490 = vcmp.lt.s32.totalorder %v534, %v308
        %vm1491 = vcmp.lt.s32.totalorder %v535, %v305
        %vm1492 = vcmp.lt.s32.totalorder %v535, %v306
        %vm1493 = vcmp.lt.s32.totalorder %v535, %v307
        %vm1494 = vcmp.lt.s32.totalorder %v535, %v308
        %vm1495 = vcmp.lt.s32.totalorder %v536, %v305
        %vm1496 = vcmp.lt.s32.totalorder %v536, %v306
        %vm1497 = vcmp.lt.s32.totalorder %v536, %v307
        %vm1498 = vcmp.lt.s32.totalorder %v536, %v308
        %vm1499 = vcmp.lt.s32.totalorder %v537, %v305
        %vm1500 = vcmp.lt.s32.totalorder %v537, %v306
        %vm1501 = vcmp.lt.s32.totalorder %v537, %v307
        %vm1502 = vcmp.lt.s32.totalorder %v537, %v308
        %vm1503 = vcmp.lt.s32.totalorder %v538, %v305
        %vm1504 = vcmp.lt.s32.totalorder %v538, %v306
        %vm1505 = vcmp.lt.s32.totalorder %v538, %v307
        %vm1506 = vcmp.lt.s32.totalorder %v538, %v308
        %vm1507 = vcmp.lt.s32.totalorder %v539, %v305
        %vm1508 = vcmp.lt.s32.totalorder %v539, %v306
        %vm1509 = vcmp.lt.s32.totalorder %v539, %v307
        %vm1510 = vcmp.lt.s32.totalorder %v539, %v308
        %vm1511 = vcmp.lt.s32.totalorder %v540, %v305
        %vm1512 = vcmp.lt.s32.totalorder %v540, %v306
        %vm1513 = vcmp.lt.s32.totalorder %v540, %v307
        %vm1514 = vcmp.lt.s32.totalorder %v540, %v308
        %vm1515 = vcmp.lt.s32.totalorder %v541, %v305
        %vm1516 = vcmp.lt.s32.totalorder %v541, %v306
        %vm1517 = vcmp.lt.s32.totalorder %v541, %v307
        %vm1518 = vcmp.lt.s32.totalorder %v541, %v308
        %vm1519 = vcmp.lt.s32.totalorder %v542, %v305
        %vm1520 = vcmp.lt.s32.totalorder %v542, %v306
        %vm1521 = vcmp.lt.s32.totalorder %v542, %v307
        %vm1522 = vcmp.lt.s32.totalorder %v542, %v308
        %vm1523 = vcmp.lt.s32.totalorder %v543, %v305
        %vm1524 = vcmp.lt.s32.totalorder %v543, %v306
        %vm1525 = vcmp.lt.s32.totalorder %v543, %v307
        %vm1526 = vcmp.lt.s32.totalorder %v543, %v308
        %vm1527 = vcmp.lt.s32.totalorder %v544, %v305
        %vm1528 = vcmp.lt.s32.totalorder %v544, %v306
        %vm1529 = vcmp.lt.s32.totalorder %v544, %v307
        %vm1530 = vcmp.lt.s32.totalorder %v544, %v308
        %vm1531 = vcmp.lt.s32.totalorder %v545, %v305
        %vm1532 = vcmp.lt.s32.totalorder %v545, %v306
        %vm1533 = vcmp.lt.s32.totalorder %v545, %v307
        %vm1534 = vcmp.lt.s32.totalorder %v545, %v308
        %vm1535 = vcmp.lt.s32.totalorder %v546, %v305
        %vm1536 = vcmp.lt.s32.totalorder %v546, %v306
        %vm1537 = vcmp.lt.s32.totalorder %v546, %v307
        %vm1538 = vcmp.lt.s32.totalorder %v546, %v308
        %vm1539 = vcmp.lt.s32.totalorder %v547, %v305
        %vm1540 = vcmp.lt.s32.totalorder %v547, %v306
        %vm1541 = vcmp.lt.s32.totalorder %v547, %v307
        %vm1542 = vcmp.lt.s32.totalorder %v547, %v308
        %vm1543 = vcmp.lt.s32.totalorder %v548, %v305
        %vm1544 = vcmp.lt.s32.totalorder %v548, %v306
        %vm1545 = vcmp.lt.s32.totalorder %v548, %v307
        %vm1546 = vcmp.lt.s32.totalorder %v548, %v308
        %vm1547 = vcmp.lt.s32.totalorder %v549, %v305
        %vm1548 = vcmp.lt.s32.totalorder %v549, %v306
        %vm1549 = vcmp.lt.s32.totalorder %v549, %v307
        %vm1550 = vcmp.lt.s32.totalorder %v549, %v308
        %vm1551 = vcmp.lt.s32.totalorder %v550, %v305
        %vm1552 = vcmp.lt.s32.totalorder %v550, %v306
        %vm1553 = vcmp.lt.s32.totalorder %v550, %v307
        %vm1554 = vcmp.lt.s32.totalorder %v550, %v308
        %vm1555 = vcmp.lt.s32.totalorder %v551, %v305
        %vm1556 = vcmp.lt.s32.totalorder %v551, %v306
        %vm1557 = vcmp.lt.s32.totalorder %v551, %v307
        %vm1558 = vcmp.lt.s32.totalorder %v551, %v308
        %vm1559 = vcmp.lt.s32.totalorder %v552, %v305
        %vm1560 = vcmp.lt.s32.totalorder %v552, %v306
        %vm1561 = vcmp.lt.s32.totalorder %v552, %v307
        %vm1562 = vcmp.lt.s32.totalorder %v552, %v308
        %vm1563 = vcmp.lt.s32.totalorder %v553, %v305
        %vm1564 = vcmp.lt.s32.totalorder %v553, %v306
        %vm1565 = vcmp.lt.s32.totalorder %v553, %v307
        %vm1566 = vcmp.lt.s32.totalorder %v553, %v308
        %vm1567 = vcmp.lt.s32.totalorder %v554, %v305
        %vm1568 = vcmp.lt.s32.totalorder %v554, %v306
        %vm1569 = vcmp.lt.s32.totalorder %v554, %v307
        %vm1570 = vcmp.lt.s32.totalorder %v554, %v308
        %vm1571 = vcmp.lt.s32.totalorder %v555, %v305
        %vm1572 = vcmp.lt.s32.totalorder %v555, %v306
        %vm1573 = vcmp.lt.s32.totalorder %v555, %v307
        %vm1574 = vcmp.lt.s32.totalorder %v555, %v308
        %vm1575 = vcmp.lt.s32.totalorder %v556, %v305
        %vm1576 = vcmp.lt.s32.totalorder %v556, %v306
        %vm1577 = vcmp.lt.s32.totalorder %v556, %v307
        %vm1578 = vcmp.lt.s32.totalorder %v556, %v308
        %vm1579 = vcmp.lt.s32.totalorder %v557, %v305
        %vm1580 = vcmp.lt.s32.totalorder %v557, %v306
        %vm1581 = vcmp.lt.s32.totalorder %v557, %v307
        %vm1582 = vcmp.lt.s32.totalorder %v557, %v308
        %vm1583 = vcmp.lt.s32.totalorder %v558, %v305
        %vm1584 = vcmp.lt.s32.totalorder %v558, %v306
        %vm1585 = vcmp.lt.s32.totalorder %v558, %v307
        %vm1586 = vcmp.lt.s32.totalorder %v558, %v308
        %vm1587 = vcmp.lt.s32.totalorder %v559, %v305
        %vm1588 = vcmp.lt.s32.totalorder %v559, %v306
        %vm1589 = vcmp.lt.s32.totalorder %v559, %v307
        %vm1590 = vcmp.lt.s32.totalorder %v559, %v308
        %vm1591 = vcmp.lt.s32.totalorder %v560, %v305
        %vm1592 = vcmp.lt.s32.totalorder %v560, %v306
        %vm1593 = vcmp.lt.s32.totalorder %v560, %v307
        %vm1594 = vcmp.lt.s32.totalorder %v560, %v308
        %vm1595 = vcmp.lt.s32.totalorder %v561, %v305
        %vm1596 = vcmp.lt.s32.totalorder %v561, %v306
        %vm1597 = vcmp.lt.s32.totalorder %v561, %v307
        %vm1598 = vcmp.lt.s32.totalorder %v561, %v308
        %vm1599 = vcmp.lt.s32.totalorder %v562, %v305
        %vm1600 = vcmp.lt.s32.totalorder %v562, %v306
        %vm1601 = vcmp.lt.s32.totalorder %v562, %v307
        %vm1602 = vcmp.lt.s32.totalorder %v562, %v308
        %vm1603 = vcmp.lt.s32.totalorder %v563, %v305
        %vm1604 = vcmp.lt.s32.totalorder %v563, %v306
        %vm1605 = vcmp.lt.s32.totalorder %v563, %v307
        %vm1606 = vcmp.lt.s32.totalorder %v563, %v308
        %vm1607 = vcmp.lt.s32.totalorder %v564, %v305
        %vm1608 = vcmp.lt.s32.totalorder %v564, %v306
        %vm1609 = vcmp.lt.s32.totalorder %v564, %v307
        %vm1610 = vcmp.lt.s32.totalorder %v564, %v308
        %vm1611 = vcmp.lt.s32.totalorder %v565, %v305
        %vm1612 = vcmp.lt.s32.totalorder %v565, %v306
        %vm1613 = vcmp.lt.s32.totalorder %v565, %v307
        %vm1614 = vcmp.lt.s32.totalorder %v565, %v308
        %vm1615 = vcmp.lt.s32.totalorder %v566, %v305
        %vm1616 = vcmp.lt.s32.totalorder %v566, %v306
        %vm1617 = vcmp.lt.s32.totalorder %v566, %v307
        %vm1618 = vcmp.lt.s32.totalorder %v566, %v308
        %vm1619 = vcmp.lt.s32.totalorder %v567, %v305
        %vm1620 = vcmp.lt.s32.totalorder %v567, %v306
        %vm1621 = vcmp.lt.s32.totalorder %v567, %v307
        %vm1622 = vcmp.lt.s32.totalorder %v567, %v308
        %vm1623 = vcmp.lt.s32.totalorder %v568, %v305
        %vm1624 = vcmp.lt.s32.totalorder %v568, %v306
        %vm1625 = vcmp.lt.s32.totalorder %v568, %v307
        %vm1626 = vcmp.lt.s32.totalorder %v568, %v308
        %vm1627 = vcmp.lt.s32.totalorder %v569, %v305
        %vm1628 = vcmp.lt.s32.totalorder %v569, %v306
        %vm1629 = vcmp.lt.s32.totalorder %v569, %v307
        %vm1630 = vcmp.lt.s32.totalorder %v569, %v308
        %vm1631 = vcmp.lt.s32.totalorder %v570, %v305
        %vm1632 = vcmp.lt.s32.totalorder %v570, %v306
        %vm1633 = vcmp.lt.s32.totalorder %v570, %v307
        %vm1634 = vcmp.lt.s32.totalorder %v570, %v308
        %vm1635 = vcmp.lt.s32.totalorder %v571, %v305
        %vm1636 = vcmp.lt.s32.totalorder %v571, %v306
        %vm1637 = vcmp.lt.s32.totalorder %v571, %v307
        %vm1638 = vcmp.lt.s32.totalorder %v571, %v308
        %vm1639 = vcmp.lt.s32.totalorder %v572, %v305
        %vm1640 = vcmp.lt.s32.totalorder %v572, %v306
        %vm1641 = vcmp.lt.s32.totalorder %v572, %v307
        %vm1642 = vcmp.lt.s32.totalorder %v572, %v308
        %vm1643 = vcmp.lt.s32.totalorder %v573, %v305
        %vm1644 = vcmp.lt.s32.totalorder %v573, %v306
        %vm1645 = vcmp.lt.s32.totalorder %v573, %v307
        %vm1646 = vcmp.lt.s32.totalorder %v573, %v308
        %vm1647 = vcmp.lt.s32.totalorder %v574, %v305
        %vm1648 = vcmp.lt.s32.totalorder %v574, %v306
        %vm1649 = vcmp.lt.s32.totalorder %v574, %v307
        %vm1650 = vcmp.lt.s32.totalorder %v574, %v308
        %vm1651 = vcmp.lt.s32.totalorder %v575, %v305
        %vm1652 = vcmp.lt.s32.totalorder %v575, %v306
        %vm1653 = vcmp.lt.s32.totalorder %v575, %v307
        %vm1654 = vcmp.lt.s32.totalorder %v575, %v308
        %vm1655 = vcmp.lt.s32.totalorder %v576, %v305
        %vm1656 = vcmp.lt.s32.totalorder %v576, %v306
        %vm1657 = vcmp.lt.s32.totalorder %v576, %v307
        %vm1658 = vcmp.lt.s32.totalorder %v576, %v308
        %vm1659 = vcmp.lt.s32.totalorder %v577, %v305
        %vm1660 = vcmp.lt.s32.totalorder %v577, %v306
        %vm1661 = vcmp.lt.s32.totalorder %v577, %v307
        %vm1662 = vcmp.lt.s32.totalorder %v577, %v308
        %vm1663 = vcmp.lt.s32.totalorder %v578, %v305
        %vm1664 = vcmp.lt.s32.totalorder %v578, %v306
        %vm1665 = vcmp.lt.s32.totalorder %v578, %v307
        %vm1666 = vcmp.lt.s32.totalorder %v578, %v308
        %vm1667 = vmand %vm1155, %vm1411
        %vm1668 = vmand %vm1156, %vm1412
        %vm1669 = vmand %vm1157, %vm1413
        %vm1670 = vmand %vm1158, %vm1414
        %vm1671 = vmand %vm1159, %vm1415
        %vm1672 = vmand %vm1160, %vm1416
        %vm1673 = vmand %vm1161, %vm1417
        %vm1674 = vmand %vm1162, %vm1418
        %vm1675 = vmand %vm1163, %vm1419
        %vm1676 = vmand %vm1164, %vm1420
        %vm1677 = vmand %vm1165, %vm1421
        %vm1678 = vmand %vm1166, %vm1422
        %vm1679 = vmand %vm1167, %vm1423
        %vm1680 = vmand %vm1168, %vm1424
        %vm1681 = vmand %vm1169, %vm1425
        %vm1682 = vmand %vm1170, %vm1426
        %vm1683 = vmand %vm1171, %vm1427
        %vm1684 = vmand %vm1172, %vm1428
        %vm1685 = vmand %vm1173, %vm1429
        %vm1686 = vmand %vm1174, %vm1430
        %vm1687 = vmand %vm1175, %vm1431
        %vm1688 = vmand %vm1176, %vm1432
        %vm1689 = vmand %vm1177, %vm1433
        %vm1690 = vmand %vm1178, %vm1434
        %vm1691 = vmand %vm1179, %vm1435
        %vm1692 = vmand %vm1180, %vm1436
        %vm1693 = vmand %vm1181, %vm1437
        %vm1694 = vmand %vm1182, %vm1438
        %vm1695 = vmand %vm1183, %vm1439
        %vm1696 = vmand %vm1184, %vm1440
        %vm1697 = vmand %vm1185, %vm1441
        %vm1698 = vmand %vm1186, %vm1442
        %vm1699 = vmand %vm1187, %vm1443
        %vm1700 = vmand %vm1188, %vm1444
        %vm1701 = vmand %vm1189, %vm1445
        %vm1702 = vmand %vm1190, %vm1446
        %vm1703 = vmand %vm1191, %vm1447
        %vm1704 = vmand %vm1192, %vm1448
        %vm1705 = vmand %vm1193, %vm1449
        %vm1706 = vmand %vm1194, %vm1450
        %vm1707 = vmand %vm1195, %vm1451
        %vm1708 = vmand %vm1196, %vm1452
        %vm1709 = vmand %vm1197, %vm1453
        %vm1710 = vmand %vm1198, %vm1454
        %vm1711 = vmand %vm1199, %vm1455
        %vm1712 = vmand %vm1200, %vm1456
        %vm1713 = vmand %vm1201, %vm1457
        %vm1714 = vmand %vm1202, %vm1458
        %vm1715 = vmand %vm1203, %vm1459
        %vm1716 = vmand %vm1204, %vm1460
        %vm1717 = vmand %vm1205, %vm1461
        %vm1718 = vmand %vm1206, %vm1462
        %vm1719 = vmand %vm1207, %vm1463
        %vm1720 = vmand %vm1208, %vm1464
        %vm1721 = vmand %vm1209, %vm1465
        %vm1722 = vmand %vm1210, %vm1466
        %vm1723 = vmand %vm1211, %vm1467
        %vm1724 = vmand %vm1212, %vm1468
        %vm1725 = vmand %vm1213, %vm1469
        %vm1726 = vmand %vm1214, %vm1470
        %vm1727 = vmand %vm1215, %vm1471
        %vm1728 = vmand %vm1216, %vm1472
        %vm1729 = vmand %vm1217, %vm1473
        %vm1730 = vmand %vm1218, %vm1474
        %vm1731 = vmand %vm1219, %vm1475
        %vm1732 = vmand %vm1220, %vm1476
        %vm1733 = vmand %vm1221, %vm1477
        %vm1734 = vmand %vm1222, %vm1478
        %vm1735 = vmand %vm1223, %vm1479
        %vm1736 = vmand %vm1224, %vm1480
        %vm1737 = vmand %vm1225, %vm1481
        %vm1738 = vmand %vm1226, %vm1482
        %vm1739 = vmand %vm1227, %vm1483
        %vm1740 = vmand %vm1228, %vm1484
        %vm1741 = vmand %vm1229, %vm1485
        %vm1742 = vmand %vm1230, %vm1486
        %vm1743 = vmand %vm1231, %vm1487
        %vm1744 = vmand %vm1232, %vm1488
        %vm1745 = vmand %vm1233, %vm1489
        %vm1746 = vmand %vm1234, %vm1490
        %vm1747 = vmand %vm1235, %vm1491
        %vm1748 = vmand %vm1236, %vm1492
        %vm1749 = vmand %vm1237, %vm1493
        %vm1750 = vmand %vm1238, %vm1494
        %vm1751 = vmand %vm1239, %vm1495
        %vm1752 = vmand %vm1240, %vm1496
        %vm1753 = vmand %vm1241, %vm1497
        %vm1754 = vmand %vm1242, %vm1498
        %vm1755 = vmand %vm1243, %vm1499
        %vm1756 = vmand %vm1244, %vm1500
        %vm1757 = vmand %vm1245, %vm1501
        %vm1758 = vmand %vm1246, %vm1502
        %vm1759 = vmand %vm1247, %vm1503
        %vm1760 = vmand %vm1248, %vm1504
        %vm1761 = vmand %vm1249, %vm1505
        %vm1762 = vmand %vm1250, %vm1506
        %vm1763 = vmand %vm1251, %vm1507
        %vm1764 = vmand %vm1252, %vm1508
        %vm1765 = vmand %vm1253, %vm1509
        %vm1766 = vmand %vm1254, %vm1510
        %vm1767 = vmand %vm1255, %vm1511
        %vm1768 = vmand %vm1256, %vm1512
        %vm1769 = vmand %vm1257, %vm1513
        %vm1770 = vmand %vm1258, %vm1514
        %vm1771 = vmand %vm1259, %vm1515
        %vm1772 = vmand %vm1260, %vm1516
        %vm1773 = vmand %vm1261, %vm1517
        %vm1774 = vmand %vm1262, %vm1518
        %vm1775 = vmand %vm1263, %vm1519
        %vm1776 = vmand %vm1264, %vm1520
        %vm1777 = vmand %vm1265, %vm1521
        %vm1778 = vmand %vm1266, %vm1522
        %vm1779 = vmand %vm1267, %vm1523
        %vm1780 = vmand %vm1268, %vm1524
        %vm1781 = vmand %vm1269, %vm1525
        %vm1782 = vmand %vm1270, %vm1526
        %vm1783 = vmand %vm1271, %vm1527
        %vm1784 = vmand %vm1272, %vm1528
        %vm1785 = vmand %vm1273, %vm1529
        %vm1786 = vmand %vm1274, %vm1530
        %vm1787 = vmand %vm1275, %vm1531
        %vm1788 = vmand %vm1276, %vm1532
        %vm1789 = vmand %vm1277, %vm1533
        %vm1790 = vmand %vm1278, %vm1534
        %vm1791 = vmand %vm1279, %vm1535
        %vm1792 = vmand %vm1280, %vm1536
        %vm1793 = vmand %vm1281, %vm1537
        %vm1794 = vmand %vm1282, %vm1538
        %vm1795 = vmand %vm1283, %vm1539
        %vm1796 = vmand %vm1284, %vm1540
        %vm1797 = vmand %vm1285, %vm1541
        %vm1798 = vmand %vm1286, %vm1542
        %vm1799 = vmand %vm1287, %vm1543
        %vm1800 = vmand %vm1288, %vm1544
        %vm1801 = vmand %vm1289, %vm1545
        %vm1802 = vmand %vm1290, %vm1546
        %vm1803 = vmand %vm1291, %vm1547
        %vm1804 = vmand %vm1292, %vm1548
        %vm1805 = vmand %vm1293, %vm1549
        %vm1806 = vmand %vm1294, %vm1550
        %vm1807 = vmand %vm1295, %vm1551
        %vm1808 = vmand %vm1296, %vm1552
        %vm1809 = vmand %vm1297, %vm1553
        %vm1810 = vmand %vm1298, %vm1554
        %vm1811 = vmand %vm1299, %vm1555
        %vm1812 = vmand %vm1300, %vm1556
        %vm1813 = vmand %vm1301, %vm1557
        %vm1814 = vmand %vm1302, %vm1558
        %vm1815 = vmand %vm1303, %vm1559
        %vm1816 = vmand %vm1304, %vm1560
        %vm1817 = vmand %vm1305, %vm1561
        %vm1818 = vmand %vm1306, %vm1562
        %vm1819 = vmand %vm1307, %vm1563
        %vm1820 = vmand %vm1308, %vm1564
        %vm1821 = vmand %vm1309, %vm1565
        %vm1822 = vmand %vm1310, %vm1566
        %vm1823 = vmand %vm1311, %vm1567
        %vm1824 = vmand %vm1312, %vm1568
        %vm1825 = vmand %vm1313, %vm1569
        %vm1826 = vmand %vm1314, %vm1570
        %vm1827 = vmand %vm1315, %vm1571
        %vm1828 = vmand %vm1316, %vm1572
        %vm1829 = vmand %vm1317, %vm1573
        %vm1830 = vmand %vm1318, %vm1574
        %vm1831 = vmand %vm1319, %vm1575
        %vm1832 = vmand %vm1320, %vm1576
        %vm1833 = vmand %vm1321, %vm1577
        %vm1834 = vmand %vm1322, %vm1578
        %vm1835 = vmand %vm1323, %vm1579
        %vm1836 = vmand %vm1324, %vm1580
        %vm1837 = vmand %vm1325, %vm1581
        %vm1838 = vmand %vm1326, %vm1582
        %vm1839 = vmand %vm1327, %vm1583
        %vm1840 = vmand %vm1328, %vm1584
        %vm1841 = vmand %vm1329, %vm1585
        %vm1842 = vmand %vm1330, %vm1586
        %vm1843 = vmand %vm1331, %vm1587
        %vm1844 = vmand %vm1332, %vm1588
        %vm1845 = vmand %vm1333, %vm1589
        %vm1846 = vmand %vm1334, %vm1590
        %vm1847 = vmand %vm1335, %vm1591
        %vm1848 = vmand %vm1336, %vm1592
        %vm1849 = vmand %vm1337, %vm1593
        %vm1850 = vmand %vm1338, %vm1594
        %vm1851 = vmand %vm1339, %vm1595
        %vm1852 = vmand %vm1340, %vm1596
        %vm1853 = vmand %vm1341, %vm1597
        %vm1854 = vmand %vm1342, %vm1598
        %vm1855 = vmand %vm1343, %vm1599
        %vm1856 = vmand %vm1344, %vm1600
        %vm1857 = vmand %vm1345, %vm1601
        %vm1858 = vmand %vm1346, %vm1602
        %vm1859 = vmand %vm1347, %vm1603
        %vm1860 = vmand %vm1348, %vm1604
        %vm1861 = vmand %vm1349, %vm1605
        %vm1862 = vmand %vm1350, %vm1606
        %vm1863 = vmand %vm1351, %vm1607
        %vm1864 = vmand %vm1352, %vm1608
        %vm1865 = vmand %vm1353, %vm1609
        %vm1866 = vmand %vm1354, %vm1610
        %vm1867 = vmand %vm1355, %vm1611
        %vm1868 = vmand %vm1356, %vm1612
        %vm1869 = vmand %vm1357, %vm1613
        %vm1870 = vmand %vm1358, %vm1614
        %vm1871 = vmand %vm1359, %vm1615
        %vm1872 = vmand %vm1360, %vm1616
        %vm1873 = vmand %vm1361, %vm1617
        %vm1874 = vmand %vm1362, %vm1618
        %vm1875 = vmand %vm1363, %vm1619
        %vm1876 = vmand %vm1364, %vm1620
        %vm1877 = vmand %vm1365, %vm1621
        %vm1878 = vmand %vm1366, %vm1622
        %vm1879 = vmand %vm1367, %vm1623
        %vm1880 = vmand %vm1368, %vm1624
        %vm1881 = vmand %vm1369, %vm1625
        %vm1882 = vmand %vm1370, %vm1626
        %vm1883 = vmand %vm1371, %vm1627
        %vm1884 = vmand %vm1372, %vm1628
        %vm1885 = vmand %vm1373, %vm1629
        %vm1886 = vmand %vm1374, %vm1630
        %vm1887 = vmand %vm1375, %vm1631
        %vm1888 = vmand %vm1376, %vm1632
        %vm1889 = vmand %vm1377, %vm1633
        %vm1890 = vmand %vm1378, %vm1634
        %vm1891 = vmand %vm1379, %vm1635
        %vm1892 = vmand %vm1380, %vm1636
        %vm1893 = vmand %vm1381, %vm1637
        %vm1894 = vmand %vm1382, %vm1638
        %vm1895 = vmand %vm1383, %vm1639
        %vm1896 = vmand %vm1384, %vm1640
        %vm1897 = vmand %vm1385, %vm1641
        %vm1898 = vmand %vm1386, %vm1642
        %vm1899 = vmand %vm1387, %vm1643
        %vm1900 = vmand %vm1388, %vm1644
        %vm1901 = vmand %vm1389, %vm1645
        %vm1902 = vmand %vm1390, %vm1646
        %vm1903 = vmand %vm1391, %vm1647
        %vm1904 = vmand %vm1392, %vm1648
        %vm1905 = vmand %vm1393, %vm1649
        %vm1906 = vmand %vm1394, %vm1650
        %vm1907 = vmand %vm1395, %vm1651
        %vm1908 = vmand %vm1396, %vm1652
        %vm1909 = vmand %vm1397, %vm1653
        %vm1910 = vmand %vm1398, %vm1654
        %vm1911 = vmand %vm1399, %vm1655
        %vm1912 = vmand %vm1400, %vm1656
        %vm1913 = vmand %vm1401, %vm1657
        %vm1914 = vmand %vm1402, %vm1658
        %vm1915 = vmand %vm1403, %vm1659
        %vm1916 = vmand %vm1404, %vm1660
        %vm1917 = vmand %vm1405, %vm1661
        %vm1918 = vmand %vm1406, %vm1662
        %vm1919 = vmand %vm1407, %vm1663
        %vm1920 = vmand %vm1408, %vm1664
        %vm1921 = vmand %vm1409, %vm1665
        %vm1922 = vmand %vm1410, %vm1666
        %vm1923 = vmor %vm899, %vm1667
        %vm1924 = vmor %vm900, %vm1668
        %vm1925 = vmor %vm901, %vm1669
        %vm1926 = vmor %vm902, %vm1670
        %vm1927 = vmor %vm903, %vm1671
        %vm1928 = vmor %vm904, %vm1672
        %vm1929 = vmor %vm905, %vm1673
        %vm1930 = vmor %vm906, %vm1674
        %vm1931 = vmor %vm907, %vm1675
        %vm1932 = vmor %vm908, %vm1676
        %vm1933 = vmor %vm909, %vm1677
        %vm1934 = vmor %vm910, %vm1678
        %vm1935 = vmor %vm911, %vm1679
        %vm1936 = vmor %vm912, %vm1680
        %vm1937 = vmor %vm913, %vm1681
        %vm1938 = vmor %vm914, %vm1682
        %vm1939 = vmor %vm915, %vm1683
        %vm1940 = vmor %vm916, %vm1684
        %vm1941 = vmor %vm917, %vm1685
        %vm1942 = vmor %vm918, %vm1686
        %vm1943 = vmor %vm919, %vm1687
        %vm1944 = vmor %vm920, %vm1688
        %vm1945 = vmor %vm921, %vm1689
        %vm1946 = vmor %vm922, %vm1690
        %vm1947 = vmor %vm923, %vm1691
        %vm1948 = vmor %vm924, %vm1692
        %vm1949 = vmor %vm925, %vm1693
        %vm1950 = vmor %vm926, %vm1694
        %vm1951 = vmor %vm927, %vm1695
        %vm1952 = vmor %vm928, %vm1696
        %vm1953 = vmor %vm929, %vm1697
        %vm1954 = vmor %vm930, %vm1698
        %vm1955 = vmor %vm931, %vm1699
        %vm1956 = vmor %vm932, %vm1700
        %vm1957 = vmor %vm933, %vm1701
        %vm1958 = vmor %vm934, %vm1702
        %vm1959 = vmor %vm935, %vm1703
        %vm1960 = vmor %vm936, %vm1704
        %vm1961 = vmor %vm937, %vm1705
        %vm1962 = vmor %vm938, %vm1706
        %vm1963 = vmor %vm939, %vm1707
        %vm1964 = vmor %vm940, %vm1708
        %vm1965 = vmor %vm941, %vm1709
        %vm1966 = vmor %vm942, %vm1710
        %vm1967 = vmor %vm943, %vm1711
        %vm1968 = vmor %vm944, %vm1712
        %vm1969 = vmor %vm945, %vm1713
        %vm1970 = vmor %vm946, %vm1714
        %vm1971 = vmor %vm947, %vm1715
        %vm1972 = vmor %vm948, %vm1716
        %vm1973 = vmor %vm949, %vm1717
        %vm1974 = vmor %vm950, %vm1718
        %vm1975 = vmor %vm951, %vm1719
        %vm1976 = vmor %vm952, %vm1720
        %vm1977 = vmor %vm953, %vm1721
        %vm1978 = vmor %vm954, %vm1722
        %vm1979 = vmor %vm955, %vm1723
        %vm1980 = vmor %vm956, %vm1724
        %vm1981 = vmor %vm957, %vm1725
        %vm1982 = vmor %vm958, %vm1726
        %vm1983 = vmor %vm959, %vm1727
        %vm1984 = vmor %vm960, %vm1728
        %vm1985 = vmor %vm961, %vm1729
        %vm1986 = vmor %vm962, %vm1730
        %vm1987 = vmor %vm963, %vm1731
        %vm1988 = vmor %vm964, %vm1732
        %vm1989 = vmor %vm965, %vm1733
        %vm1990 = vmor %vm966, %vm1734
        %vm1991 = vmor %vm967, %vm1735
        %vm1992 = vmor %vm968, %vm1736
        %vm1993 = vmor %vm969, %vm1737
        %vm1994 = vmor %vm970, %vm1738
        %vm1995 = vmor %vm971, %vm1739
        %vm1996 = vmor %vm972, %vm1740
        %vm1997 = vmor %vm973, %vm1741
        %vm1998 = vmor %vm974, %vm1742
        %vm1999 = vmor %vm975, %vm1743
        %vm2000 = vmor %vm976, %vm1744
        %vm2001 = vmor %vm977, %vm1745
        %vm2002 = vmor %vm978, %vm1746
        %vm2003 = vmor %vm979, %vm1747
        %vm2004 = vmor %vm980, %vm1748
        %vm2005 = vmor %vm981, %vm1749
        %vm2006 = vmor %vm982, %vm1750
        %vm2007 = vmor %vm983, %vm1751
        %vm2008 = vmor %vm984, %vm1752
        %vm2009 = vmor %vm985, %vm1753
        %vm2010 = vmor %vm986, %vm1754
        %vm2011 = vmor %vm987, %vm1755
        %vm2012 = vmor %vm988, %vm1756
        %vm2013 = vmor %vm989, %vm1757
        %vm2014 = vmor %vm990, %vm1758
        %vm2015 = vmor %vm991, %vm1759
        %vm2016 = vmor %vm992, %vm1760
        %vm2017 = vmor %vm993, %vm1761
        %vm2018 = vmor %vm994, %vm1762
        %vm2019 = vmor %vm995, %vm1763
        %vm2020 = vmor %vm996, %vm1764
        %vm2021 = vmor %vm997, %vm1765
        %vm2022 = vmor %vm998, %vm1766
        %vm2023 = vmor %vm999, %vm1767
        %vm2024 = vmor %vm1000, %vm1768
        %vm2025 = vmor %vm1001, %vm1769
        %vm2026 = vmor %vm1002, %vm1770
        %vm2027 = vmor %vm1003, %vm1771
        %vm2028 = vmor %vm1004, %vm1772
        %vm2029 = vmor %vm1005, %vm1773
        %vm2030 = vmor %vm1006, %vm1774
        %vm2031 = vmor %vm1007, %vm1775
        %vm2032 = vmor %vm1008, %vm1776
        %vm2033 = vmor %vm1009, %vm1777
        %vm2034 = vmor %vm1010, %vm1778
        %vm2035 = vmor %vm1011, %vm1779
        %vm2036 = vmor %vm1012, %vm1780
        %vm2037 = vmor %vm1013, %vm1781
        %vm2038 = vmor %vm1014, %vm1782
        %vm2039 = vmor %vm1015, %vm1783
        %vm2040 = vmor %vm1016, %vm1784
        %vm2041 = vmor %vm1017, %vm1785
        %vm2042 = vmor %vm1018, %vm1786
        %vm2043 = vmor %vm1019, %vm1787
        %vm2044 = vmor %vm1020, %vm1788
        %vm2045 = vmor %vm1021, %vm1789
        %vm2046 = vmor %vm1022, %vm1790
        %vm2047 = vmor %vm1023, %vm1791
        %vm2048 = vmor %vm1024, %vm1792
        %vm2049 = vmor %vm1025, %vm1793
        %vm2050 = vmor %vm1026, %vm1794
        %vm2051 = vmor %vm1027, %vm1795
        %vm2052 = vmor %vm1028, %vm1796
        %vm2053 = vmor %vm1029, %vm1797
        %vm2054 = vmor %vm1030, %vm1798
        %vm2055 = vmor %vm1031, %vm1799
        %vm2056 = vmor %vm1032, %vm1800
        %vm2057 = vmor %vm1033, %vm1801
        %vm2058 = vmor %vm1034, %vm1802
        %vm2059 = vmor %vm1035, %vm1803
        %vm2060 = vmor %vm1036, %vm1804
        %vm2061 = vmor %vm1037, %vm1805
        %vm2062 = vmor %vm1038, %vm1806
        %vm2063 = vmor %vm1039, %vm1807
        %vm2064 = vmor %vm1040, %vm1808
        %vm2065 = vmor %vm1041, %vm1809
        %vm2066 = vmor %vm1042, %vm1810
        %vm2067 = vmor %vm1043, %vm1811
        %vm2068 = vmor %vm1044, %vm1812
        %vm2069 = vmor %vm1045, %vm1813
        %vm2070 = vmor %vm1046, %vm1814
        %vm2071 = vmor %vm1047, %vm1815
        %vm2072 = vmor %vm1048, %vm1816
        %vm2073 = vmor %vm1049, %vm1817
        %vm2074 = vmor %vm1050, %vm1818
        %vm2075 = vmor %vm1051, %vm1819
        %vm2076 = vmor %vm1052, %vm1820
        %vm2077 = vmor %vm1053, %vm1821
        %vm2078 = vmor %vm1054, %vm1822
        %vm2079 = vmor %vm1055, %vm1823
        %vm2080 = vmor %vm1056, %vm1824
        %vm2081 = vmor %vm1057, %vm1825
        %vm2082 = vmor %vm1058, %vm1826
        %vm2083 = vmor %vm1059, %vm1827
        %vm2084 = vmor %vm1060, %vm1828
        %vm2085 = vmor %vm1061, %vm1829
        %vm2086 = vmor %vm1062, %vm1830
        %vm2087 = vmor %vm1063, %vm1831
        %vm2088 = vmor %vm1064, %vm1832
        %vm2089 = vmor %vm1065, %vm1833
        %vm2090 = vmor %vm1066, %vm1834
        %vm2091 = vmor %vm1067, %vm1835
        %vm2092 = vmor %vm1068, %vm1836
        %vm2093 = vmor %vm1069, %vm1837
        %vm2094 = vmor %vm1070, %vm1838
        %vm2095 = vmor %vm1071, %vm1839
        %vm2096 = vmor %vm1072, %vm1840
        %vm2097 = vmor %vm1073, %vm1841
        %vm2098 = vmor %vm1074, %vm1842
        %vm2099 = vmor %vm1075, %vm1843
        %vm2100 = vmor %vm1076, %vm1844
        %vm2101 = vmor %vm1077, %vm1845
        %vm2102 = vmor %vm1078, %vm1846
        %vm2103 = vmor %vm1079, %vm1847
        %vm2104 = vmor %vm1080, %vm1848
        %vm2105 = vmor %vm1081, %vm1849
        %vm2106 = vmor %vm1082, %vm1850
        %vm2107 = vmor %vm1083, %vm1851
        %vm2108 = vmor %vm1084, %vm1852
        %vm2109 = vmor %vm1085, %vm1853
        %vm2110 = vmor %vm1086, %vm1854
        %vm2111 = vmor %vm1087, %vm1855
        %vm2112 = vmor %vm1088, %vm1856
        %vm2113 = vmor %vm1089, %vm1857
        %vm2114 = vmor %vm1090, %vm1858
        %vm2115 = vmor %vm1091, %vm1859
        %vm2116 = vmor %vm1092, %vm1860
        %vm2117 = vmor %vm1093, %vm1861
        %vm2118 = vmor %vm1094, %vm1862
        %vm2119 = vmor %vm1095, %vm1863
        %vm2120 = vmor %vm1096, %vm1864
        %vm2121 = vmor %vm1097, %vm1865
        %vm2122 = vmor %vm1098, %vm1866
        %vm2123 = vmor %vm1099, %vm1867
        %vm2124 = vmor %vm1100, %vm1868
        %vm2125 = vmor %vm1101, %vm1869
        %vm2126 = vmor %vm1102, %vm1870
        %vm2127 = vmor %vm1103, %vm1871
        %vm2128 = vmor %vm1104, %vm1872
        %vm2129 = vmor %vm1105, %vm1873
        %vm2130 = vmor %vm1106, %vm1874
        %vm2131 = vmor %vm1107, %vm1875
        %vm2132 = vmor %vm1108, %vm1876
        %vm2133 = vmor %vm1109, %vm1877
        %vm2134 = vmor %vm1110, %vm1878
        %vm2135 = vmor %vm1111, %vm1879
        %vm2136 = vmor %vm1112, %vm1880
        %vm2137 = vmor %vm1113, %vm1881
        %vm2138 = vmor %vm1114, %vm1882
        %vm2139 = vmor %vm1115, %vm1883
        %vm2140 = vmor %vm1116, %vm1884
        %vm2141 = vmor %vm1117, %vm1885
        %vm2142 = vmor %vm1118, %vm1886
        %vm2143 = vmor %vm1119, %vm1887
        %vm2144 = vmor %vm1120, %vm1888
        %vm2145 = vmor %vm1121, %vm1889
        %vm2146 = vmor %vm1122, %vm1890
        %vm2147 = vmor %vm1123, %vm1891
        %vm2148 = vmor %vm1124, %vm1892
        %vm2149 = vmor %vm1125, %vm1893
        %vm2150 = vmor %vm1126, %vm1894
        %vm2151 = vmor %vm1127, %vm1895
        %vm2152 = vmor %vm1128, %vm1896
        %vm2153 = vmor %vm1129, %vm1897
        %vm2154 = vmor %vm1130, %vm1898
        %vm2155 = vmor %vm1131, %vm1899
        %vm2156 = vmor %vm1132, %vm1900
        %vm2157 = vmor %vm1133, %vm1901
        %vm2158 = vmor %vm1134, %vm1902
        %vm2159 = vmor %vm1135, %vm1903
        %vm2160 = vmor %vm1136, %vm1904
        %vm2161 = vmor %vm1137, %vm1905
        %vm2162 = vmor %vm1138, %vm1906
        %vm2163 = vmor %vm1139, %vm1907
        %vm2164 = vmor %vm1140, %vm1908
        %vm2165 = vmor %vm1141, %vm1909
        %vm2166 = vmor %vm1142, %vm1910
        %vm2167 = vmor %vm1143, %vm1911
        %vm2168 = vmor %vm1144, %vm1912
        %vm2169 = vmor %vm1145, %vm1913
        %vm2170 = vmor %vm1146, %vm1914
        %vm2171 = vmor %vm1147, %vm1915
        %vm2172 = vmor %vm1148, %vm1916
        %vm2173 = vmor %vm1149, %vm1917
        %vm2174 = vmor %vm1150, %vm1918
        %vm2175 = vmor %vm1151, %vm1919
        %vm2176 = vmor %vm1152, %vm1920
        %vm2177 = vmor %vm1153, %vm1921
        %vm2178 = vmor %vm1154, %vm1922
        %v2179 = vsel %vm1923, 1.0, 0.0
        %v2180 = vsel %vm1924, 1.0, 0.0
        %v2181 = vsel %vm1925, 1.0, 0.0
        %v2182 = vsel %vm1926, 1.0, 0.0
        %v2183 = vsel %vm1927, 1.0, 0.0
        %v2184 = vsel %vm1928, 1.0, 0.0
        %v2185 = vsel %vm1929, 1.0, 0.0
        %v2186 = vsel %vm1930, 1.0, 0.0
        %v2187 = vsel %vm1931, 1.0, 0.0
        %v2188 = vsel %vm1932, 1.0, 0.0
        %v2189 = vsel %vm1933, 1.0, 0.0
        %v2190 = vsel %vm1934, 1.0, 0.0
        %v2191 = vsel %vm1935, 1.0, 0.0
        %v2192 = vsel %vm1936, 1.0, 0.0
        %v2193 = vsel %vm1937, 1.0, 0.0
        %v2194 = vsel %vm1938, 1.0, 0.0
        %v2195 = vsel %vm1939, 1.0, 0.0
        %v2196 = vsel %vm1940, 1.0, 0.0
        %v2197 = vsel %vm1941, 1.0, 0.0
        %v2198 = vsel %vm1942, 1.0, 0.0
        %v2199 = vsel %vm1943, 1.0, 0.0
        %v2200 = vsel %vm1944, 1.0, 0.0
        %v2201 = vsel %vm1945, 1.0, 0.0
        %v2202 = vsel %vm1946, 1.0, 0.0
        %v2203 = vsel %vm1947, 1.0, 0.0
        %v2204 = vsel %vm1948, 1.0, 0.0
        %v2205 = vsel %vm1949, 1.0, 0.0
        %v2206 = vsel %vm1950, 1.0, 0.0
        %v2207 = vsel %vm1951, 1.0, 0.0
        %v2208 = vsel %vm1952, 1.0, 0.0
        %v2209 = vsel %vm1953, 1.0, 0.0
        %v2210 = vsel %vm1954, 1.0, 0.0
        %v2211 = vsel %vm1955, 1.0, 0.0
        %v2212 = vsel %vm1956, 1.0, 0.0
        %v2213 = vsel %vm1957, 1.0, 0.0
        %v2214 = vsel %vm1958, 1.0, 0.0
        %v2215 = vsel %vm1959, 1.0, 0.0
        %v2216 = vsel %vm1960, 1.0, 0.0
        %v2217 = vsel %vm1961, 1.0, 0.0
        %v2218 = vsel %vm1962, 1.0, 0.0
        %v2219 = vsel %vm1963, 1.0, 0.0
        %v2220 = vsel %vm1964, 1.0, 0.0
        %v2221 = vsel %vm1965, 1.0, 0.0
        %v2222 = vsel %vm1966, 1.0, 0.0
        %v2223 = vsel %vm1967, 1.0, 0.0
        %v2224 = vsel %vm1968, 1.0, 0.0
        %v2225 = vsel %vm1969, 1.0, 0.0
        %v2226 = vsel %vm1970, 1.0, 0.0
        %v2227 = vsel %vm1971, 1.0, 0.0
        %v2228 = vsel %vm1972, 1.0, 0.0
        %v2229 = vsel %vm1973, 1.0, 0.0
        %v2230 = vsel %vm1974, 1.0, 0.0
        %v2231 = vsel %vm1975, 1.0, 0.0
        %v2232 = vsel %vm1976, 1.0, 0.0
        %v2233 = vsel %vm1977, 1.0, 0.0
        %v2234 = vsel %vm1978, 1.0, 0.0
        %v2235 = vsel %vm1979, 1.0, 0.0
        %v2236 = vsel %vm1980, 1.0, 0.0
        %v2237 = vsel %vm1981, 1.0, 0.0
        %v2238 = vsel %vm1982, 1.0, 0.0
        %v2239 = vsel %vm1983, 1.0, 0.0
        %v2240 = vsel %vm1984, 1.0, 0.0
        %v2241 = vsel %vm1985, 1.0, 0.0
        %v2242 = vsel %vm1986, 1.0, 0.0
        %v2243 = vsel %vm1987, 1.0, 0.0
        %v2244 = vsel %vm1988, 1.0, 0.0
        %v2245 = vsel %vm1989, 1.0, 0.0
        %v2246 = vsel %vm1990, 1.0, 0.0
        %v2247 = vsel %vm1991, 1.0, 0.0
        %v2248 = vsel %vm1992, 1.0, 0.0
        %v2249 = vsel %vm1993, 1.0, 0.0
        %v2250 = vsel %vm1994, 1.0, 0.0
        %v2251 = vsel %vm1995, 1.0, 0.0
        %v2252 = vsel %vm1996, 1.0, 0.0
        %v2253 = vsel %vm1997, 1.0, 0.0
        %v2254 = vsel %vm1998, 1.0, 0.0
        %v2255 = vsel %vm1999, 1.0, 0.0
        %v2256 = vsel %vm2000, 1.0, 0.0
        %v2257 = vsel %vm2001, 1.0, 0.0
        %v2258 = vsel %vm2002, 1.0, 0.0
        %v2259 = vsel %vm2003, 1.0, 0.0
        %v2260 = vsel %vm2004, 1.0, 0.0
        %v2261 = vsel %vm2005, 1.0, 0.0
        %v2262 = vsel %vm2006, 1.0, 0.0
        %v2263 = vsel %vm2007, 1.0, 0.0
        %v2264 = vsel %vm2008, 1.0, 0.0
        %v2265 = vsel %vm2009, 1.0, 0.0
        %v2266 = vsel %vm2010, 1.0, 0.0
        %v2267 = vsel %vm2011, 1.0, 0.0
        %v2268 = vsel %vm2012, 1.0, 0.0
        %v2269 = vsel %vm2013, 1.0, 0.0
        %v2270 = vsel %vm2014, 1.0, 0.0
        %v2271 = vsel %vm2015, 1.0, 0.0
        %v2272 = vsel %vm2016, 1.0, 0.0
        %v2273 = vsel %vm2017, 1.0, 0.0
        %v2274 = vsel %vm2018, 1.0, 0.0
        %v2275 = vsel %vm2019, 1.0, 0.0
        %v2276 = vsel %vm2020, 1.0, 0.0
        %v2277 = vsel %vm2021, 1.0, 0.0
        %v2278 = vsel %vm2022, 1.0, 0.0
        %v2279 = vsel %vm2023, 1.0, 0.0
        %v2280 = vsel %vm2024, 1.0, 0.0
        %v2281 = vsel %vm2025, 1.0, 0.0
        %v2282 = vsel %vm2026, 1.0, 0.0
        %v2283 = vsel %vm2027, 1.0, 0.0
        %v2284 = vsel %vm2028, 1.0, 0.0
        %v2285 = vsel %vm2029, 1.0, 0.0
        %v2286 = vsel %vm2030, 1.0, 0.0
        %v2287 = vsel %vm2031, 1.0, 0.0
        %v2288 = vsel %vm2032, 1.0, 0.0
        %v2289 = vsel %vm2033, 1.0, 0.0
        %v2290 = vsel %vm2034, 1.0, 0.0
        %v2291 = vsel %vm2035, 1.0, 0.0
        %v2292 = vsel %vm2036, 1.0, 0.0
        %v2293 = vsel %vm2037, 1.0, 0.0
        %v2294 = vsel %vm2038, 1.0, 0.0
        %v2295 = vsel %vm2039, 1.0, 0.0
        %v2296 = vsel %vm2040, 1.0, 0.0
        %v2297 = vsel %vm2041, 1.0, 0.0
        %v2298 = vsel %vm2042, 1.0, 0.0
        %v2299 = vsel %vm2043, 1.0, 0.0
        %v2300 = vsel %vm2044, 1.0, 0.0
        %v2301 = vsel %vm2045, 1.0, 0.0
        %v2302 = vsel %vm2046, 1.0, 0.0
        %v2303 = vsel %vm2047, 1.0, 0.0
        %v2304 = vsel %vm2048, 1.0, 0.0
        %v2305 = vsel %vm2049, 1.0, 0.0
        %v2306 = vsel %vm2050, 1.0, 0.0
        %v2307 = vsel %vm2051, 1.0, 0.0
        %v2308 = vsel %vm2052, 1.0, 0.0
        %v2309 = vsel %vm2053, 1.0, 0.0
        %v2310 = vsel %vm2054, 1.0, 0.0
        %v2311 = vsel %vm2055, 1.0, 0.0
        %v2312 = vsel %vm2056, 1.0, 0.0
        %v2313 = vsel %vm2057, 1.0, 0.0
        %v2314 = vsel %vm2058, 1.0, 0.0
        %v2315 = vsel %vm2059, 1.0, 0.0
        %v2316 = vsel %vm2060, 1.0, 0.0
        %v2317 = vsel %vm2061, 1.0, 0.0
        %v2318 = vsel %vm2062, 1.0, 0.0
        %v2319 = vsel %vm2063, 1.0, 0.0
        %v2320 = vsel %vm2064, 1.0, 0.0
        %v2321 = vsel %vm2065, 1.0, 0.0
        %v2322 = vsel %vm2066, 1.0, 0.0
        %v2323 = vsel %vm2067, 1.0, 0.0
        %v2324 = vsel %vm2068, 1.0, 0.0
        %v2325 = vsel %vm2069, 1.0, 0.0
        %v2326 = vsel %vm2070, 1.0, 0.0
        %v2327 = vsel %vm2071, 1.0, 0.0
        %v2328 = vsel %vm2072, 1.0, 0.0
        %v2329 = vsel %vm2073, 1.0, 0.0
        %v2330 = vsel %vm2074, 1.0, 0.0
        %v2331 = vsel %vm2075, 1.0, 0.0
        %v2332 = vsel %vm2076, 1.0, 0.0
        %v2333 = vsel %vm2077, 1.0, 0.0
        %v2334 = vsel %vm2078, 1.0, 0.0
        %v2335 = vsel %vm2079, 1.0, 0.0
        %v2336 = vsel %vm2080, 1.0, 0.0
        %v2337 = vsel %vm2081, 1.0, 0.0
        %v2338 = vsel %vm2082, 1.0, 0.0
        %v2339 = vsel %vm2083, 1.0, 0.0
        %v2340 = vsel %vm2084, 1.0, 0.0
        %v2341 = vsel %vm2085, 1.0, 0.0
        %v2342 = vsel %vm2086, 1.0, 0.0
        %v2343 = vsel %vm2087, 1.0, 0.0
        %v2344 = vsel %vm2088, 1.0, 0.0
        %v2345 = vsel %vm2089, 1.0, 0.0
        %v2346 = vsel %vm2090, 1.0, 0.0
        %v2347 = vsel %vm2091, 1.0, 0.0
        %v2348 = vsel %vm2092, 1.0, 0.0
        %v2349 = vsel %vm2093, 1.0, 0.0
        %v2350 = vsel %vm2094, 1.0, 0.0
        %v2351 = vsel %vm2095, 1.0, 0.0
        %v2352 = vsel %vm2096, 1.0, 0.0
        %v2353 = vsel %vm2097, 1.0, 0.0
        %v2354 = vsel %vm2098, 1.0, 0.0
        %v2355 = vsel %vm2099, 1.0, 0.0
        %v2356 = vsel %vm2100, 1.0, 0.0
        %v2357 = vsel %vm2101, 1.0, 0.0
        %v2358 = vsel %vm2102, 1.0, 0.0
        %v2359 = vsel %vm2103, 1.0, 0.0
        %v2360 = vsel %vm2104, 1.0, 0.0
        %v2361 = vsel %vm2105, 1.0, 0.0
        %v2362 = vsel %vm2106, 1.0, 0.0
        %v2363 = vsel %vm2107, 1.0, 0.0
        %v2364 = vsel %vm2108, 1.0, 0.0
        %v2365 = vsel %vm2109, 1.0, 0.0
        %v2366 = vsel %vm2110, 1.0, 0.0
        %v2367 = vsel %vm2111, 1.0, 0.0
        %v2368 = vsel %vm2112, 1.0, 0.0
        %v2369 = vsel %vm2113, 1.0, 0.0
        %v2370 = vsel %vm2114, 1.0, 0.0
        %v2371 = vsel %vm2115, 1.0, 0.0
        %v2372 = vsel %vm2116, 1.0, 0.0
        %v2373 = vsel %vm2117, 1.0, 0.0
        %v2374 = vsel %vm2118, 1.0, 0.0
        %v2375 = vsel %vm2119, 1.0, 0.0
        %v2376 = vsel %vm2120, 1.0, 0.0
        %v2377 = vsel %vm2121, 1.0, 0.0
        %v2378 = vsel %vm2122, 1.0, 0.0
        %v2379 = vsel %vm2123, 1.0, 0.0
        %v2380 = vsel %vm2124, 1.0, 0.0
        %v2381 = vsel %vm2125, 1.0, 0.0
        %v2382 = vsel %vm2126, 1.0, 0.0
        %v2383 = vsel %vm2127, 1.0, 0.0
        %v2384 = vsel %vm2128, 1.0, 0.0
        %v2385 = vsel %vm2129, 1.0, 0.0
        %v2386 = vsel %vm2130, 1.0, 0.0
        %v2387 = vsel %vm2131, 1.0, 0.0
        %v2388 = vsel %vm2132, 1.0, 0.0
        %v2389 = vsel %vm2133, 1.0, 0.0
        %v2390 = vsel %vm2134, 1.0, 0.0
        %v2391 = vsel %vm2135, 1.0, 0.0
        %v2392 = vsel %vm2136, 1.0, 0.0
        %v2393 = vsel %vm2137, 1.0, 0.0
        %v2394 = vsel %vm2138, 1.0, 0.0
        %v2395 = vsel %vm2139, 1.0, 0.0
        %v2396 = vsel %vm2140, 1.0, 0.0
        %v2397 = vsel %vm2141, 1.0, 0.0
        %v2398 = vsel %vm2142, 1.0, 0.0
        %v2399 = vsel %vm2143, 1.0, 0.0
        %v2400 = vsel %vm2144, 1.0, 0.0
        %v2401 = vsel %vm2145, 1.0, 0.0
        %v2402 = vsel %vm2146, 1.0, 0.0
        %v2403 = vsel %vm2147, 1.0, 0.0
        %v2404 = vsel %vm2148, 1.0, 0.0
        %v2405 = vsel %vm2149, 1.0, 0.0
        %v2406 = vsel %vm2150, 1.0, 0.0
        %v2407 = vsel %vm2151, 1.0, 0.0
        %v2408 = vsel %vm2152, 1.0, 0.0
        %v2409 = vsel %vm2153, 1.0, 0.0
        %v2410 = vsel %vm2154, 1.0, 0.0
        %v2411 = vsel %vm2155, 1.0, 0.0
        %v2412 = vsel %vm2156, 1.0, 0.0
        %v2413 = vsel %vm2157, 1.0, 0.0
        %v2414 = vsel %vm2158, 1.0, 0.0
        %v2415 = vsel %vm2159, 1.0, 0.0
        %v2416 = vsel %vm2160, 1.0, 0.0
        %v2417 = vsel %vm2161, 1.0, 0.0
        %v2418 = vsel %vm2162, 1.0, 0.0
        %v2419 = vsel %vm2163, 1.0, 0.0
        %v2420 = vsel %vm2164, 1.0, 0.0
        %v2421 = vsel %vm2165, 1.0, 0.0
        %v2422 = vsel %vm2166, 1.0, 0.0
        %v2423 = vsel %vm2167, 1.0, 0.0
        %v2424 = vsel %vm2168, 1.0, 0.0
        %v2425 = vsel %vm2169, 1.0, 0.0
        %v2426 = vsel %vm2170, 1.0, 0.0
        %v2427 = vsel %vm2171, 1.0, 0.0
        %v2428 = vsel %vm2172, 1.0, 0.0
        %v2429 = vsel %vm2173, 1.0, 0.0
        %v2430 = vsel %vm2174, 1.0, 0.0
        %v2431 = vsel %vm2175, 1.0, 0.0
        %v2432 = vsel %vm2176, 1.0, 0.0
        %v2433 = vsel %vm2177, 1.0, 0.0
        %v2434 = vsel %vm2178, 1.0, 0.0
        %v2435 = vpack.c.bf16 %v2183, %v2179
        %v2436 = vpack.c.bf16 %v2184, %v2180
        %v2437 = vpack.c.bf16 %v2185, %v2181
        %v2438 = vpack.c.bf16 %v2186, %v2182
        %v2439 = vpack.c.bf16 %v2191, %v2187
        %v2440 = vpack.c.bf16 %v2192, %v2188
        %v2441 = vpack.c.bf16 %v2193, %v2189
        %v2442 = vpack.c.bf16 %v2194, %v2190
        %v2443 = vpack.c.bf16 %v2199, %v2195
        %v2444 = vpack.c.bf16 %v2200, %v2196
        %v2445 = vpack.c.bf16 %v2201, %v2197
        %v2446 = vpack.c.bf16 %v2202, %v2198
        %v2447 = vpack.c.bf16 %v2207, %v2203
        %v2448 = vpack.c.bf16 %v2208, %v2204
        %v2449 = vpack.c.bf16 %v2209, %v2205
        %v2450 = vpack.c.bf16 %v2210, %v2206
        %v2451 = vpack.c.bf16 %v2215, %v2211
        %v2452 = vpack.c.bf16 %v2216, %v2212
        %v2453 = vpack.c.bf16 %v2217, %v2213
        %v2454 = vpack.c.bf16 %v2218, %v2214
        %v2455 = vpack.c.bf16 %v2223, %v2219
        %v2456 = vpack.c.bf16 %v2224, %v2220
        %v2457 = vpack.c.bf16 %v2225, %v2221
        %v2458 = vpack.c.bf16 %v2226, %v2222
        %v2459 = vpack.c.bf16 %v2231, %v2227
        %v2460 = vpack.c.bf16 %v2232, %v2228
        %v2461 = vpack.c.bf16 %v2233, %v2229
        %v2462 = vpack.c.bf16 %v2234, %v2230
        %v2463 = vpack.c.bf16 %v2239, %v2235
        %v2464 = vpack.c.bf16 %v2240, %v2236
        %v2465 = vpack.c.bf16 %v2241, %v2237
        %v2466 = vpack.c.bf16 %v2242, %v2238
        %v2467 = vpack.c.bf16 %v2247, %v2243
        %v2468 = vpack.c.bf16 %v2248, %v2244
        %v2469 = vpack.c.bf16 %v2249, %v2245
        %v2470 = vpack.c.bf16 %v2250, %v2246
        %v2471 = vpack.c.bf16 %v2255, %v2251
        %v2472 = vpack.c.bf16 %v2256, %v2252
        %v2473 = vpack.c.bf16 %v2257, %v2253
        %v2474 = vpack.c.bf16 %v2258, %v2254
        %v2475 = vpack.c.bf16 %v2263, %v2259
        %v2476 = vpack.c.bf16 %v2264, %v2260
        %v2477 = vpack.c.bf16 %v2265, %v2261
        %v2478 = vpack.c.bf16 %v2266, %v2262
        %v2479 = vpack.c.bf16 %v2271, %v2267
        %v2480 = vpack.c.bf16 %v2272, %v2268
        %v2481 = vpack.c.bf16 %v2273, %v2269
        %v2482 = vpack.c.bf16 %v2274, %v2270
        %v2483 = vpack.c.bf16 %v2279, %v2275
        %v2484 = vpack.c.bf16 %v2280, %v2276
        %v2485 = vpack.c.bf16 %v2281, %v2277
        %v2486 = vpack.c.bf16 %v2282, %v2278
        %v2487 = vpack.c.bf16 %v2287, %v2283
        %v2488 = vpack.c.bf16 %v2288, %v2284
        %v2489 = vpack.c.bf16 %v2289, %v2285
        %v2490 = vpack.c.bf16 %v2290, %v2286
        %v2491 = vpack.c.bf16 %v2295, %v2291
        %v2492 = vpack.c.bf16 %v2296, %v2292
        %v2493 = vpack.c.bf16 %v2297, %v2293
        %v2494 = vpack.c.bf16 %v2298, %v2294
        %v2495 = vpack.c.bf16 %v2303, %v2299
        %v2496 = vpack.c.bf16 %v2304, %v2300
        %v2497 = vpack.c.bf16 %v2305, %v2301
        %v2498 = vpack.c.bf16 %v2306, %v2302
        %v2499 = vpack.c.bf16 %v2311, %v2307
        %v2500 = vpack.c.bf16 %v2312, %v2308
        %v2501 = vpack.c.bf16 %v2313, %v2309
        %v2502 = vpack.c.bf16 %v2314, %v2310
        %v2503 = vpack.c.bf16 %v2319, %v2315
        %v2504 = vpack.c.bf16 %v2320, %v2316
        %v2505 = vpack.c.bf16 %v2321, %v2317
        %v2506 = vpack.c.bf16 %v2322, %v2318
        %v2507 = vpack.c.bf16 %v2327, %v2323
        %v2508 = vpack.c.bf16 %v2328, %v2324
        %v2509 = vpack.c.bf16 %v2329, %v2325
        %v2510 = vpack.c.bf16 %v2330, %v2326
        %v2511 = vpack.c.bf16 %v2335, %v2331
        %v2512 = vpack.c.bf16 %v2336, %v2332
        %v2513 = vpack.c.bf16 %v2337, %v2333
        %v2514 = vpack.c.bf16 %v2338, %v2334
        %v2515 = vpack.c.bf16 %v2343, %v2339
        %v2516 = vpack.c.bf16 %v2344, %v2340
        %v2517 = vpack.c.bf16 %v2345, %v2341
        %v2518 = vpack.c.bf16 %v2346, %v2342
        %v2519 = vpack.c.bf16 %v2351, %v2347
        %v2520 = vpack.c.bf16 %v2352, %v2348
        %v2521 = vpack.c.bf16 %v2353, %v2349
        %v2522 = vpack.c.bf16 %v2354, %v2350
        %v2523 = vpack.c.bf16 %v2359, %v2355
        %v2524 = vpack.c.bf16 %v2360, %v2356
        %v2525 = vpack.c.bf16 %v2361, %v2357
        %v2526 = vpack.c.bf16 %v2362, %v2358
        %v2527 = vpack.c.bf16 %v2367, %v2363
        %v2528 = vpack.c.bf16 %v2368, %v2364
        %v2529 = vpack.c.bf16 %v2369, %v2365
        %v2530 = vpack.c.bf16 %v2370, %v2366
        %v2531 = vpack.c.bf16 %v2375, %v2371
        %v2532 = vpack.c.bf16 %v2376, %v2372
        %v2533 = vpack.c.bf16 %v2377, %v2373
        %v2534 = vpack.c.bf16 %v2378, %v2374
        %v2535 = vpack.c.bf16 %v2383, %v2379
        %v2536 = vpack.c.bf16 %v2384, %v2380
        %v2537 = vpack.c.bf16 %v2385, %v2381
        %v2538 = vpack.c.bf16 %v2386, %v2382
        %v2539 = vpack.c.bf16 %v2391, %v2387
        %v2540 = vpack.c.bf16 %v2392, %v2388
        %v2541 = vpack.c.bf16 %v2393, %v2389
        %v2542 = vpack.c.bf16 %v2394, %v2390
        %v2543 = vpack.c.bf16 %v2399, %v2395
        %v2544 = vpack.c.bf16 %v2400, %v2396
        %v2545 = vpack.c.bf16 %v2401, %v2397
        %v2546 = vpack.c.bf16 %v2402, %v2398
        %v2547 = vpack.c.bf16 %v2407, %v2403
        %v2548 = vpack.c.bf16 %v2408, %v2404
        %v2549 = vpack.c.bf16 %v2409, %v2405
        %v2550 = vpack.c.bf16 %v2410, %v2406
        %v2551 = vpack.c.bf16 %v2415, %v2411
        %v2552 = vpack.c.bf16 %v2416, %v2412
        %v2553 = vpack.c.bf16 %v2417, %v2413
        %v2554 = vpack.c.bf16 %v2418, %v2414
        %v2555 = vpack.c.bf16 %v2423, %v2419
        %v2556 = vpack.c.bf16 %v2424, %v2420
        %v2557 = vpack.c.bf16 %v2425, %v2421
        %v2558 = vpack.c.bf16 %v2426, %v2422
        %v2559 = vpack.c.bf16 %v2431, %v2427
        %v2560 = vpack.c.bf16 %v2432, %v2428
        %v2561 = vpack.c.bf16 %v2433, %v2429
        %v2562 = vpack.c.bf16 %v2434, %v2430
        %v2564 = vlaneseq
        %v2565 = vshrl.u32 %v2564, 7
        %v2566 = vsub.s32 0, %v2565
        %v2567 = vrot.slane %v316, %v2566
        %v2568 = vlaneseq
        %v2569 = vshrl.u32 %v2568, 7
        %v2570 = vsub.s32 1, %v2569
        %v2571 = vrot.slane %v316, %v2570
        %v2572 = vlaneseq
        %v2573 = vshrl.u32 %v2572, 7
        %v2574 = vsub.s32 2, %v2573
        %v2575 = vrot.slane %v316, %v2574
        %v2576 = vlaneseq
        %v2577 = vshrl.u32 %v2576, 7
        %v2578 = vsub.s32 3, %v2577
        %v2579 = vrot.slane %v316, %v2578
        %vm2584 = vcmp.eq.s32.totalorder %v515, 0
        %vm2585 = vcmp.eq.s32.totalorder %v516, 0
        %vm2586 = vcmp.eq.s32.totalorder %v515, 1
        %vm2587 = vcmp.eq.s32.totalorder %v516, 1
        %v2588 = vsel %vm2586, 1.0, 0.0
        %v2589 = vsel %vm2587, 1.0, 0.0
        %v2590 = vsel %vm2584, %v2567, %v2588
        %v2591 = vsel %vm2584, %v2571, %v2588
        %v2592 = vsel %vm2584, %v2575, %v2588
        %v2593 = vsel %vm2584, %v2579, %v2588
        %v2594 = vsel %vm2585, %v2567, %v2589
        %v2595 = vsel %vm2585, %v2571, %v2589
        %v2596 = vsel %vm2585, %v2575, %v2589
        %v2597 = vsel %vm2585, %v2579, %v2589
        %v2598 = vpack.c.bf16 %v2594, %v2590
        %v2599 = vpack.c.bf16 %v2595, %v2591
        %v2600 = vpack.c.bf16 %v2596, %v2592
        %v2601 = vpack.c.bf16 %v2597, %v2593
        %2602 = vmatprep.subr.bf16.mxu0 %v2436
        %2603 = vmatpush1.bf16.msra.mxu0 %v2435
        %2604 = vmatprep.subr.bf16.mxu0 %v2440
        %2605 = vmatpush1.bf16.msra.mxu0 %v2439
        %2606 = vmatprep.subr.bf16.mxu0 %v2444
        %2607 = vmatpush1.bf16.msra.mxu0 %v2443
        %2608 = vmatprep.subr.bf16.mxu0 %v2448
        %2609 = vmatpush1.bf16.msra.mxu0 %v2447
        %2610 = vmatprep.subr.bf16.mxu0 %v2452
        %2611 = vmatpush1.bf16.msra.mxu0 %v2451
        %2612 = vmatprep.subr.bf16.mxu0 %v2456
        %2613 = vmatpush1.bf16.msra.mxu0 %v2455
        %2614 = vmatprep.subr.bf16.mxu0 %v2460
        %2615 = vmatpush1.bf16.msra.mxu0 %v2459
        %2616 = vmatprep.subr.bf16.mxu0 %v2464
        %2617 = vmatpush1.bf16.msra.mxu0 %v2463
        %2618 = vmatprep.subr.bf16.mxu0 %v2468
        %2619 = vmatpush1.bf16.msra.mxu0 %v2467
        %2620 = vmatprep.subr.bf16.mxu0 %v2472
        %2621 = vmatpush1.bf16.msra.mxu0 %v2471
        %2622 = vmatprep.subr.bf16.mxu0 %v2476
        %2623 = vmatpush1.bf16.msra.mxu0 %v2475
        %2624 = vmatprep.subr.bf16.mxu0 %v2480
        %2625 = vmatpush1.bf16.msra.mxu0 %v2479
        %2626 = vmatprep.subr.bf16.mxu0 %v2484
        %2627 = vmatpush1.bf16.msra.mxu0 %v2483
        %2628 = vmatprep.subr.bf16.mxu0 %v2488
        %2629 = vmatpush1.bf16.msra.mxu0 %v2487
        %2630 = vmatprep.subr.bf16.mxu0 %v2492
        %2631 = vmatpush1.bf16.msra.mxu0 %v2491
        %2632 = vmatprep.subr.bf16.mxu0 %v2496
        %2633 = vmatpush1.bf16.msra.mxu0 %v2495
        %2634 = vmatprep.mubr.bf16.mxu0 %v2599
        %2635 = vmatmul.mubr.bf16.gmra.mrb[0].mxu0 %v2598
        %v2636 = vpop.f32.mrb[0].mxu0
        %v2637 = vadd.f32 0.0, %v2636
        %v2638 = vpop.f32.mrb[0].mxu0
        %v2639 = vadd.f32 0.0, %v2638
        %v2640 = vpop.f32.mrb[0].mxu0
        %v2641 = vpop.f32.mrb[0].mxu0
        %2642 = vdwg.mxu0
        %2643 = vmatprep.subr.bf16.mxu0 %v2500
        %2644 = vmatpush1.bf16.msra.mxu0 %v2499
        %2645 = vmatprep.subr.bf16.mxu0 %v2504
        %2646 = vmatpush1.bf16.msra.mxu0 %v2503
        %2647 = vmatprep.subr.bf16.mxu0 %v2508
        %2648 = vmatpush1.bf16.msra.mxu0 %v2507
        %2649 = vmatprep.subr.bf16.mxu0 %v2512
        %2650 = vmatpush1.bf16.msra.mxu0 %v2511
        %2651 = vmatprep.subr.bf16.mxu0 %v2516
        %2652 = vmatpush1.bf16.msra.mxu0 %v2515
        %2653 = vmatprep.subr.bf16.mxu0 %v2520
        %2654 = vmatpush1.bf16.msra.mxu0 %v2519
        %2655 = vmatprep.subr.bf16.mxu0 %v2524
        %2656 = vmatpush1.bf16.msra.mxu0 %v2523
        %2657 = vmatprep.subr.bf16.mxu0 %v2528
        %2658 = vmatpush1.bf16.msra.mxu0 %v2527
        %2659 = vmatprep.subr.bf16.mxu0 %v2532
        %2660 = vmatpush1.bf16.msra.mxu0 %v2531
        %2661 = vmatprep.subr.bf16.mxu0 %v2536
        %2662 = vmatpush1.bf16.msra.mxu0 %v2535
        %2663 = vmatprep.subr.bf16.mxu0 %v2540
        %2664 = vmatpush1.bf16.msra.mxu0 %v2539
        %2665 = vmatprep.subr.bf16.mxu0 %v2544
        %2666 = vmatpush1.bf16.msra.mxu0 %v2543
        %2667 = vmatprep.subr.bf16.mxu0 %v2548
        %2668 = vmatpush1.bf16.msra.mxu0 %v2547
        %2669 = vmatprep.subr.bf16.mxu0 %v2552
        %2670 = vmatpush1.bf16.msra.mxu0 %v2551
        %2671 = vmatprep.subr.bf16.mxu0 %v2556
        %2672 = vmatpush1.bf16.msra.mxu0 %v2555
        %2673 = vmatprep.subr.bf16.mxu0 %v2560
        %2674 = vmatpush1.bf16.msra.mxu0 %v2559
        %2675 = vmatprep.mubr.bf16.mxu0 %v2601
        %2676 = vmatmul.mubr.bf16.gmra.mrb[0].mxu0 %v2600
        %v2677 = vpop.f32.mrb[0].mxu0
        %v2678 = vadd.f32 %v2637, %v2677
        %v2679 = vpop.f32.mrb[0].mxu0
        %v2680 = vadd.f32 %v2639, %v2679
        %v2681 = vpop.f32.mrb[0].mxu0
        %v2682 = vpop.f32.mrb[0].mxu0
        %2683 = vdwg.mxu0
        %2684 = vmatprep.subr.bf16.mxu0 %v2438
        %2685 = vmatpush1.bf16.msra.mxu0 %v2437
        %2686 = vmatprep.subr.bf16.mxu0 %v2442
        %2687 = vmatpush1.bf16.msra.mxu0 %v2441
        %2688 = vmatprep.subr.bf16.mxu0 %v2446
        %2689 = vmatpush1.bf16.msra.mxu0 %v2445
        %2690 = vmatprep.subr.bf16.mxu0 %v2450
        %2691 = vmatpush1.bf16.msra.mxu0 %v2449
        %2692 = vmatprep.subr.bf16.mxu0 %v2454
        %2693 = vmatpush1.bf16.msra.mxu0 %v2453
        %2694 = vmatprep.subr.bf16.mxu0 %v2458
        %2695 = vmatpush1.bf16.msra.mxu0 %v2457
        %2696 = vmatprep.subr.bf16.mxu0 %v2462
        %2697 = vmatpush1.bf16.msra.mxu0 %v2461
        %2698 = vmatprep.subr.bf16.mxu0 %v2466
        %2699 = vmatpush1.bf16.msra.mxu0 %v2465
        %2700 = vmatprep.subr.bf16.mxu0 %v2470
        %2701 = vmatpush1.bf16.msra.mxu0 %v2469
        %2702 = vmatprep.subr.bf16.mxu0 %v2474
        %2703 = vmatpush1.bf16.msra.mxu0 %v2473
        %2704 = vmatprep.subr.bf16.mxu0 %v2478
        %2705 = vmatpush1.bf16.msra.mxu0 %v2477
        %2706 = vmatprep.subr.bf16.mxu0 %v2482
        %2707 = vmatpush1.bf16.msra.mxu0 %v2481
        %2708 = vmatprep.subr.bf16.mxu0 %v2486
        %2709 = vmatpush1.bf16.msra.mxu0 %v2485
        %2710 = vmatprep.subr.bf16.mxu0 %v2490
        %2711 = vmatpush1.bf16.msra.mxu0 %v2489
        %2712 = vmatprep.subr.bf16.mxu0 %v2494
        %2713 = vmatpush1.bf16.msra.mxu0 %v2493
        %2714 = vmatprep.subr.bf16.mxu0 %v2498
        %2715 = vmatpush1.bf16.msra.mxu0 %v2497
        %2716 = vmatprep.mubr.bf16.mxu0 %v2599
        %2717 = vmatmul.mubr.bf16.gmra.mrb[0].mxu0 %v2598
        %v2718 = vpop.f32.mrb[0].mxu0
        %v2719 = vadd.f32 0.0, %v2718
        %v2720 = vpop.f32.mrb[0].mxu0
        %v2721 = vadd.f32 0.0, %v2720
        %v2722 = vpop.f32.mrb[0].mxu0
        %v2723 = vpop.f32.mrb[0].mxu0
        %2724 = vdwg.mxu0
        %2725 = vmatprep.subr.bf16.mxu0 %v2502
        %2726 = vmatpush1.bf16.msra.mxu0 %v2501
        %2727 = vmatprep.subr.bf16.mxu0 %v2506
        %2728 = vmatpush1.bf16.msra.mxu0 %v2505
        %2729 = vmatprep.subr.bf16.mxu0 %v2510
        %2730 = vmatpush1.bf16.msra.mxu0 %v2509
        %2731 = vmatprep.subr.bf16.mxu0 %v2514
        %2732 = vmatpush1.bf16.msra.mxu0 %v2513
        %2733 = vmatprep.subr.bf16.mxu0 %v2518
        %2734 = vmatpush1.bf16.msra.mxu0 %v2517
        %2735 = vmatprep.subr.bf16.mxu0 %v2522
        %2736 = vmatpush1.bf16.msra.mxu0 %v2521
        %2737 = vmatprep.subr.bf16.mxu0 %v2526
        %2738 = vmatpush1.bf16.msra.mxu0 %v2525
        %2739 = vmatprep.subr.bf16.mxu0 %v2530
        %2740 = vmatpush1.bf16.msra.mxu0 %v2529
        %2741 = vmatprep.subr.bf16.mxu0 %v2534
        %2742 = vmatpush1.bf16.msra.mxu0 %v2533
        %2743 = vmatprep.subr.bf16.mxu0 %v2538
        %2744 = vmatpush1.bf16.msra.mxu0 %v2537
        %2745 = vmatprep.subr.bf16.mxu0 %v2542
        %2746 = vmatpush1.bf16.msra.mxu0 %v2541
        %2747 = vmatprep.subr.bf16.mxu0 %v2546
        %2748 = vmatpush1.bf16.msra.mxu0 %v2545
        %2749 = vmatprep.subr.bf16.mxu0 %v2550
        %2750 = vmatpush1.bf16.msra.mxu0 %v2549
        %2751 = vmatprep.subr.bf16.mxu0 %v2554
        %2752 = vmatpush1.bf16.msra.mxu0 %v2553
        %2753 = vmatprep.subr.bf16.mxu0 %v2558
        %2754 = vmatpush1.bf16.msra.mxu0 %v2557
        %2755 = vmatprep.subr.bf16.mxu0 %v2562
        %2756 = vmatpush1.bf16.msra.mxu0 %v2561
        %2757 = vmatprep.mubr.bf16.mxu0 %v2601
        %2758 = vmatmul.mubr.bf16.gmra.mrb[0].mxu0 %v2600
        %v2759 = vpop.f32.mrb[0].mxu0
        %v2760 = vadd.f32 %v2719, %v2759
        %v2761 = vpop.f32.mrb[0].mxu0
        %v2762 = vadd.f32 %v2721, %v2761
        %v2763 = vpop.f32.mrb[0].mxu0
        %v2764 = vpop.f32.mrb[0].mxu0
        %2765 = vdwg.mxu0
        %vm2766 = vcmask 1040384
        %v2767 = vsel %vm2766, %v2567, 0.0
        %v2768 = vsel %vm2766, %v2571, 0.0
        %v2769 = vadd.f32 %v2767, %v2768
        %v2770 = vsel %vm2766, %v2575, 0.0
        %v2771 = vadd.f32 %v2769, %v2770
        %v2772 = vsel %vm2766, %v2579, 0.0
        %v2773 = vadd.f32 %v2771, %v2772
        %2774 = vadd.xlane.f32.xlu0 %v2773
        %v2775 = vpop.xlane.xlu0 %2774
        %v2776 = vadd.f32 %v2678, %v2567
        %v2777 = vadd.f32 %v2680, %v2571
        %v2778 = vadd.f32 %v2760, %v2575
        %v2779 = vadd.f32 %v2762, %v2579
        %v2780 = vadd.f32 %v2678, 1.0
        %v2781 = vadd.f32 %v2680, 1.0
        %v2782 = vadd.f32 %v2760, 1.0
        %v2783 = vadd.f32 %v2762, 1.0
        %v2788 = vrot.slane %v2780, 1
        %v2789 = vrot.slane %v2781, 1
        %v2790 = vrot.slane %v2782, 1
        %v2791 = vrot.slane %v2783, 1
        %v2796 = vadd.f32 %v2775, %v2788
        %v2797 = vadd.f32 %v2775, %v2789
        %v2798 = vadd.f32 %v2775, %v2790
        %v2799 = vadd.f32 %v2775, %v2791
        %v2800 = vsub.f32 %v2796, %v2776
        %v2801 = vsub.f32 %v2797, %v2777
        %v2802 = vsub.f32 %v2798, %v2778
        %v2803 = vsub.f32 %v2799, %v2779
        %v2804 = vsub.f32 %v2775, %v2776
        %v2805 = vsub.f32 %v2775, %v2777
        %v2806 = vsub.f32 %v2775, %v2778
        %v2807 = vsub.f32 %v2775, %v2779
        %v2808 = vrcp.pop %v2800
        %v2809 = vmul.f32 %v2804, %v2808
        %v2810 = vrcp.pop %v2801
        %v2811 = vmul.f32 %v2805, %v2810
        %v2812 = vrcp.pop %v2802
        %v2813 = vmul.f32 %v2806, %v2812
        %v2814 = vrcp.pop %v2803
        %v2815 = vmul.f32 %v2807, %v2814
        %v2816 = vsub.f32 1.0, %v2809
        %v2817 = vsub.f32 1.0, %v2811
        %v2818 = vsub.f32 1.0, %v2813
        %v2819 = vsub.f32 1.0, %v2815
        %vm2820 = vcmp.lt.f32.partialorder %v2678, 0.5
        %vm2821 = vcmp.lt.f32.partialorder %v2680, 0.5
        %vm2822 = vcmp.lt.f32.partialorder %v2760, 0.5
        %vm2823 = vcmp.lt.f32.partialorder %v2762, 0.5
        %v2828 = vrot.slane %v2678, 1
        %v2829 = vrot.slane %v2680, 1
        %v2830 = vrot.slane %v2760, 1
        %v2831 = vrot.slane %v2762, 1
        %v2836 = vadd.f32 %v2775, %v2828
        %v2837 = vadd.f32 %v2775, %v2829
        %v2838 = vadd.f32 %v2775, %v2830
        %v2839 = vadd.f32 %v2775, %v2831
        %v2840 = vsub.f32 %v2836, %v2678
        %v2841 = vsub.f32 %v2837, %v2680
        %v2842 = vsub.f32 %v2838, %v2760
        %v2843 = vsub.f32 %v2839, %v2762
        %v2848 = vrot.slane %v2840, 7
        %v2849 = vrot.slane %v2841, 7
        %v2850 = vrot.slane %v2842, 7
        %v2851 = vrot.slane %v2843, 7
        %v2856 = vsel %vm2820, 1.0, %v2848
        %v2857 = vsel %vm2821, 1.0, %v2849
        %v2858 = vsel %vm2822, 1.0, %v2850
        %v2859 = vsel %vm2823, 1.0, %v2851
        %v2860 = vsub.f32 %v2775, %v2678
        %v2861 = vsub.f32 %v2775, %v2680
        %v2862 = vsub.f32 %v2775, %v2760
        %v2863 = vsub.f32 %v2775, %v2762
        %v2868 = vrot.slane %v2856, 1
        %v2869 = vrot.slane %v2857, 1
        %v2870 = vrot.slane %v2858, 1
        %v2871 = vrot.slane %v2859, 1
        %v2876 = vrcp.pop %v2868
        %v2877 = vmul.f32 %v2860, %v2876
        %v2878 = vrcp.pop %v2869
        %v2879 = vmul.f32 %v2861, %v2878
        %v2880 = vrcp.pop %v2870
        %v2881 = vmul.f32 %v2862, %v2880
        %v2882 = vrcp.pop %v2871
        %v2883 = vmul.f32 %v2863, %v2882
        %v2884 = vsub.f32 1.0, %v2877
        %v2885 = vsub.f32 1.0, %v2879
        %v2886 = vsub.f32 1.0, %v2881
        %v2887 = vsub.f32 1.0, %v2883
        %v2892 = vrot.slane %v2884, 7
        %v2893 = vrot.slane %v2885, 7
        %v2894 = vrot.slane %v2886, 7
        %v2895 = vrot.slane %v2887, 7
        %v2900 = vsel %vm2820, 0.0, %v2892
        %v2901 = vsel %vm2821, 0.0, %v2893
        %v2902 = vsel %vm2822, 0.0, %v2894
        %v2903 = vsel %vm2823, 0.0, %v2895
        %v2908 = vrot.slane %v2900, 1
        %v2909 = vrot.slane %v2901, 1
        %v2910 = vrot.slane %v2902, 1
        %v2911 = vrot.slane %v2903, 1
        %v2916 = vsub.f32 %v2816, %v2908
        %v2917 = vsub.f32 %v2817, %v2909
        %v2918 = vsub.f32 %v2818, %v2910
        %v2919 = vsub.f32 %v2819, %v2911
        %v2920 = vmul.f32 %v366, %v2916
        %v2921 = vmul.f32 %v367, %v2917
        %v2922 = vmul.f32 %v368, %v2918
        %v2923 = vmul.f32 %v369, %v2919
        %v2924 = vsel %vm2766, %v2920, 0.0
        %v2925 = vsel %vm2766, %v2921, 0.0
        %v2926 = vadd.f32 %v2924, %v2925
        %v2927 = vsel %vm2766, %v2922, 0.0
        %v2928 = vadd.f32 %v2926, %v2927
        %v2929 = vsel %vm2766, %v2923, 0.0
        %v2930 = vadd.f32 %v2928, %v2929
        %2931 = vadd.xlane.f32.xlu0 %v2930
        %v2932 = vpop.xlane.xlu0 %2931
        %vm2933 = vcmask 0
        %2934 = vst.msk [vmem:[%s145] sm:$0x1] %vm2933, %v2932
        %p2935 = scmp.lt.s32.totalorder %s15, 3
        %s2936 = scalar_select %p2935, %s15, 3
        %s2937 = scalar_lea.vmem %s2, %s2936
        // Predicated region
        $region37: #{tpu_custom_call.1} parent=27 // pred_check
          %p2938 = pneg %p75
        $region38: #{tpu_custom_call.1} parent=27 // pred_check_branch
          %2940 = sbr.rel (%p2938) target = $region40
        $region39: #{tpu_custom_call.1} parent=27 // pred_region
          _
        $region40: #{tpu_custom_call.1} parent=27 // pred_fallthru
          _
      $region28: #{tpu_custom_call.1} parent=5 // pred_fallthru
        _
      %p2941 = scmp.le.s32.totalorder 2, %s10
      // Predicated region
      $region41: #{tpu_custom_call.1} parent=5 // pred_check
        %p2942 = pneg %p2941
      $region42: #{tpu_custom_call.1} parent=5 // pred_check_branch
        %2944 = sbr.rel (%p2942) target = $region44
      $region43: #{tpu_custom_call.1} parent=5 // pred_region
        %s2945 = ssub.s32 %s10, 2
        // Predicated region
        $region45: #{tpu_custom_call.1} parent=43 // pred_check
          %p2946 = pneg %p81
        $region46: #{tpu_custom_call.1} parent=43 // pred_check_branch
          %2948 = sbr.rel (%p2946) target = $region48
        $region47: #{tpu_custom_call.1} parent=43 // pred_region
          %p2949 = scmp.lt.s32.totalorder %s16, 3
          %s2950 = scalar_select %p2949, %s16, 3
          %s2951 = scalar_lea.vmem %s2, %s2950
        $region48: #{tpu_custom_call.1} parent=43 // pred_fallthru
          _
      $region44: #{tpu_custom_call.1} parent=5 // pred_fallthru
        _
    $region6: #{tpu_custom_call.1} parent=1 // loop_footer
      %s14 = sadd.s32 1, %s10
    $region7: #{tpu_custom_call.1} parent=1 // loop_footer_branch
      %9 = sbr.rel target = $region3
    $region8: #{tpu_custom_call.1} parent=1 // loop_exit
      _
    %2952 = vsyncpa [#allocation3], 1
    %s2953 = scalar_lea.sflag [#allocation3], 1
    %2954 = vsyncpa %s2953, 1
    %2955 = vsyncpa [#allocation5], 1

</llo_original>
